<compile_context>
chip_gen: v7x
topology: tpu7x:2x2x1
jax: 0.10.0
libtpu: 0.0.40
codegen_flags: <defaults>
</compile_context>

<pallas_src>
import jax
import jax.numpy as jnp
from jax.experimental import pallas as pl
from jax.experimental.pallas import tpu as pltpu

# ---------------------------------------------------------------------------
# problem sizes (small, deterministic)
# ---------------------------------------------------------------------------
HID = 128                                    # GNN hidden channels ("* 128" in head dims)
B = 8                                        # batch of artworks fed to the head
N_ART, F_ART = 16, 32                        # 'artwork' nodes / feature dim
N_TT = 3                                     # task node types: style, genre, emotion
N_CLS = 4                                    # nodes per task type = classes per task
F_TASK = 16                                  # task-node feature dim
H_IN = HID + N_TT * N_CLS * HID              # 1664 = head in_features
H_MID = H_IN // 2                            # 832  = head[-3].out_features
N_OUT = N_TT * N_CLS                         # 12   = fused classifier width
TASKS = ("style", "genre", "emotion")


# ---------------------------------------------------------------------------
# Fused, pipelined forward kernel
#   grid = (task t, task-node n); one int8 W_cv block [HID, H_MID] per step.
# ---------------------------------------------------------------------------
def _fused_forward_kernel(
        scale_ref,    # SMEM [N_TT*N_CLS]      f32   per-block W_cv dequant scales
        x_ref,        # [B, HID]               f32   head input features
        x_art_ref,    # [N_ART, F_ART]         f32   'artwork' node features
        x_task_ref,   # [N_CLS, F_TASK]        f32   task-t node features (blocked)
        adj_ref,      # [N_CLS, N_ART]         f32   task-t dense adjacency (dst x src)
        w_src_ref,    # [F_ART, HID]           bf16  GAT lin_src   (task-t block)
        w_dst_ref,    # [F_TASK, HID]          bf16  GAT lin_dst   (task-t block)
        a_src_ref,    # [1, HID]               f32   GAT att_src   (task-t block)
        a_dst_ref,    # [1, HID]               f32   GAT att_dst   (task-t block)
        g_bias_ref,   # [1, HID]               f32   GAT bias      (task-t block)
        wx_ref,       # [HID, H_MID]           bf16  head weight block for x
        wcv_ref,      # [HID, H_MID]           int8  head weight block for z[t][n]
        head_b_ref,   # [1, H_MID]             f32
        out_w_ref,    # [H_MID, N_OUT]         bf16  fused per-task classifiers
        out_b_ref,    # [1, N_OUT]             f32
        o_ref,        # [B, N_OUT]             f32
        z_scr,        # VMEM [N_CLS, HID]      f32   current task's z
        cv_scr,       # VMEM [1, H_MID]        f32   running cv-head accumulator
):
    t = pl.program_id(0)
    n = pl.program_id(1)

    # seed the (batch-invariant) cv-head accumulator with the head bias once
    @pl.when(jnp.logical_and(t == 0, n == 0))
    def _init():
        cv_scr[...] = head_b_ref[...]

    # ---- bipartite single-head GATConv('artwork' -> task_t) + tanh, once / task
    @pl.when(n == 0)
    def _gat():
        h_src = jnp.dot(x_art_ref[...].astype(jnp.bfloat16), w_src_ref[...],
                        preferred_element_type=jnp.float32)            # [N_ART, HID]
        h_dst = jnp.dot(x_task_ref[...].astype(jnp.bfloat16), w_dst_ref[...],
                        preferred_element_type=jnp.float32)            # [N_CLS, HID]
        # per-dst attention logit: VPU reduce
        e_dst = jnp.sum(h_dst * a_dst_ref[...], axis=-1, keepdims=True)  # [N_CLS, 1]
        # per-src logits as a lane-major row vector (avoids a sublane->lane
        # transpose; the tiny M=1 matmul rides on an otherwise idle MXU).
        e_src = jax.lax.dot_general(
            a_src_ref[...], h_src,
            dimension_numbers=(((1,), (1,)), ((), ())),
            preferred_element_type=jnp.float32)                        # [1, N_ART]
        scores = e_dst + e_src                                          # [N_CLS, N_ART]
        scores = jnp.where(scores > 0, scores, 0.2 * scores)            # LeakyReLU(0.2)
        adj = adj_ref[...]
        masked = jnp.where(adj > 0, scores, jnp.float32(-1e30))
        m = jnp.max(masked, axis=-1, keepdims=True)
        p = jnp.where(adj > 0, jnp.exp(masked - m), 0.0)
        denom = jnp.maximum(jnp.sum(p, axis=-1, keepdims=True), 1e-16)  # keep clamp
        alpha = p / denom                                               # edge softmax
        # attention dropout: identity in eval mode
        z_scr[...] = jnp.tanh(
            jnp.dot(alpha, h_src, preferred_element_type=jnp.float32)
            + g_bias_ref[...])                                          # [N_CLS, HID]

    # ---- fold z[t][n] into the shared head: one W_cv block per grid step ------
    # (block DMA of the NEXT step overlaps this dequant + matmul)
    z_row = z_scr[pl.ds(n, 1), :]                                       # [1, HID]
    w_blk = wcv_ref[...].astype(jnp.float32)                            # int8 -> f32
    partial = jnp.dot(z_row, w_blk,
                      preferred_element_type=jnp.float32)               # [1, H_MID]
    cv_scr[...] = cv_scr[...] + partial * scale_ref[t * N_CLS + n]

    # ---- final step: shared head + three fused task classifiers ---------------
    @pl.when(jnp.logical_and(t == pl.num_programs(0) - 1,
                             n == pl.num_programs(1) - 1))
    def _head():
        # shared = ReLU(x @ W_x + cv_head + b); Dropout = identity (eval)
        x_bf = x_ref[...].astype(jnp.bfloat16)
        shared = jnp.maximum(
            jnp.dot(x_bf, wx_ref[...], preferred_element_type=jnp.float32)
            + cv_scr[...], 0.0)                                         # [B, H_MID]
        o_ref[...] = (jnp.dot(shared.astype(jnp.bfloat16), out_w_ref[...],
                              preferred_element_type=jnp.float32)
                      + out_b_ref[...])                                 # [B, N_OUT]


def forward(params, x, x_art, x_task, adj):
    bsz = x.shape[0]
    in_specs = [
        pl.BlockSpec((bsz, HID), lambda t, n, s: (0, 0)),                     # x
        pl.BlockSpec((N_ART, F_ART), lambda t, n, s: (0, 0)),                 # x_art
        pl.BlockSpec((None, N_CLS, F_TASK), lambda t, n, s: (t, 0, 0)),       # x_task
        pl.BlockSpec((None, N_CLS, N_ART), lambda t, n, s: (t, 0, 0)),        # adj
        pl.BlockSpec((None, F_ART, HID), lambda t, n, s: (t, 0, 0)),          # w_src
        pl.BlockSpec((None, F_TASK, HID), lambda t, n, s: (t, 0, 0)),         # w_dst
        pl.BlockSpec((None, 1, HID), lambda t, n, s: (t, 0, 0)),              # a_src
        pl.BlockSpec((None, 1, HID), lambda t, n, s: (t, 0, 0)),              # a_dst
        pl.BlockSpec((None, 1, HID), lambda t, n, s: (t, 0, 0)),              # g_bias
        pl.BlockSpec((HID, H_MID), lambda t, n, s: (0, 0)),                   # wx
        pl.BlockSpec((None, None, HID, H_MID), lambda t, n, s: (t, n, 0, 0)), # wcv_q
        pl.BlockSpec((1, H_MID), lambda t, n, s: (0, 0)),                     # head_b
        pl.BlockSpec((H_MID, N_OUT), lambda t, n, s: (0, 0)),                 # out_w
        pl.BlockSpec((1, N_OUT), lambda t, n, s: (0, 0)),                     # out_b
    ]
    out = pl.pallas_call(
        _fused_forward_kernel,
        out_shape=jax.ShapeDtypeStruct((bsz, N_OUT), jnp.float32),
        grid_spec=pltpu.PrefetchScalarGridSpec(
            num_scalar_prefetch=1,                       # wcv_scale -> SMEM
            grid=(N_TT, N_CLS),
            in_specs=in_specs,
            out_specs=pl.BlockSpec((bsz, N_OUT), lambda t, n, s: (0, 0)),
            scratch_shapes=[pltpu.VMEM((N_CLS, HID), jnp.float32),   # z (task t)
                            pltpu.VMEM((1, H_MID), jnp.float32)],    # cv_head acc
        ),
        compiler_params=pltpu.CompilerParams(
            dimension_semantics=("arbitrary", "arbitrary")),
    )(params["wcv_scale"], x, x_art, x_task, adj,
      params["w_src"], params["w_dst"], params["a_src"], params["a_dst"],
      params["g_bias"], params["wx"], params["wcv_q"], params["head_b"],
      params["out_w"], params["out_b"])
    # return the list-of-three task outputs (slices of the fused [B, 12] slab)
    return [out[:, i * N_CLS:(i + 1) * N_CLS] for i in range(N_TT)]


# ---------------------------------------------------------------------------
# parameters (deterministic, in-script)
# ---------------------------------------------------------------------------
def make_params(key):
    keys = iter(jax.random.split(key, 16))

    def rnd(shape, scale=0.1):
        return scale * jax.random.normal(next(keys), shape, dtype=jnp.float32)

    p = {}
    # GATConv weights for edge type ('artwork' -> task_t), stacked over tasks
    p["w_src"] = rnd((N_TT, F_ART, HID)).astype(jnp.bfloat16)
    p["w_dst"] = rnd((N_TT, F_TASK, HID)).astype(jnp.bfloat16)
    p["a_src"] = rnd((N_TT, 1, HID))
    p["a_dst"] = rnd((N_TT, 1, HID))
    p["g_bias"] = rnd((N_TT, 1, HID), 0.02)
    # shared head Linear(H_IN, H_MID), split into the x-block (bf16) and the
    # cv-blocks: one [HID, H_MID] block per (task, node), int8 + per-block scale.
    p["wx"] = rnd((HID, H_MID), 0.02).astype(jnp.bfloat16)
    wcv = rnd((N_TT, N_CLS, HID, H_MID), 0.02)
    amax = jnp.max(jnp.abs(wcv), axis=(2, 3), keepdims=True)        # [N_TT,N_CLS,1,1]
    scale = jnp.maximum(amax, 1e-8) / 127.0
    p["wcv_q"] = jnp.clip(jnp.round(wcv / scale), -127, 127).astype(jnp.int8)
    p["wcv_scale"] = scale.reshape(N_TT * N_CLS).astype(jnp.float32)
    p["head_b"] = rnd((1, H_MID), 0.02)
    # three task classifiers Linear(H_MID, N_CLS) fused into one [H_MID, 12]
    p["out_w"] = rnd((H_MID, N_OUT), 0.05).astype(jnp.bfloat16)
    p["out_b"] = rnd((1, N_OUT), 0.02)
    return p


# ---------------------------------------------------------------------------
# pure-JAX reference (same math; bf16/int8 weights dequantized to f32)
# ---------------------------------------------------------------------------
def reference(params, x, x_art, x_task, adj):
    hi = jax.lax.Precision.HIGHEST
    f32 = jnp.float32
    w_src = params["w_src"].astype(f32)
    w_dst = params["w_dst"].astype(f32)
    x_art_b = x_art.astype(jnp.bfloat16).astype(f32)
    x_task_b = x_task.astype(jnp.bfloat16).astype(f32)
    z_list = []
    for t in range(N_TT):
        h_src = jnp.dot(x_art_b, w_src[t], precision=hi)
        h_dst = jnp.dot(x_task_b[t], w_dst[t], precision=hi)
        e_dst = jnp.sum(h_dst * params["a_dst"][t], axis=-1, keepdims=True)
        e_src = jnp.sum(h_src * params["a_src"][t], axis=-1)[None, :]
        s = e_dst + e_src
        s = jnp.where(s > 0, s, 0.2 * s)
        a = adj[t]
        masked = jnp.where(a > 0, s, -1e30)
        m = jnp.max(masked, axis=-1, keepdims=True)
        p = jnp.where(a > 0, jnp.exp(masked - m), 0.0)
        alpha = p / jnp.maximum(jnp.sum(p, axis=-1, keepdims=True), 1e-16)
        z_list.append(jnp.tanh(jnp.dot(alpha, h_src, precision=hi)
                               + params["g_bias"][t]))
    # shared head: x @ W_x + vec(z) @ W_cv + b  (W_cv dequantized exactly as kernel)
    wcv_deq = (params["wcv_q"].astype(f32)
               * params["wcv_scale"].reshape(N_TT, N_CLS, 1, 1))
    cv_head = params["head_b"]
    for t in range(N_TT):
        for n in range(N_CLS):
            cv_head = cv_head + jnp.dot(z_list[t][n:n + 1, :], wcv_deq[t, n],
                                        precision=hi)
    x_b = x.astype(jnp.bfloat16).astype(f32)
    shared = jnp.maximum(
        jnp.dot(x_b, params["wx"].astype(f32), precision=hi) + cv_head, 0.0)
    shared_b = shared.astype(jnp.bfloat16).astype(f32)
    out = jnp.dot(shared_b, params["out_w"].astype(f32), precision=hi) + params["out_b"]
    return [out[:, i * N_CLS:(i + 1) * N_CLS] for i in range(N_TT)]


if __name__ == "__main__":
    key = jax.random.PRNGKey(0)
    kp, kx, ka, kt = jax.random.split(key, 4)
    params = make_params(kp)

    x = jax.random.normal(kx, (B, HID), jnp.float32)                 # head input features
    x_art = jax.random.normal(ka, (N_ART, F_ART), jnp.float32)       # 'artwork' node feats
    x_task = jax.random.normal(kt, (N_TT, N_CLS, F_TASK), jnp.float32)

    # deterministic edge set: artwork node s is connected to task node (s % N_CLS)
    adj1 = ((jnp.arange(N_ART)[None, :] % N_CLS)
            == jnp.arange(N_CLS)[:, None]).astype(jnp.float32)       # [N_CLS, N_ART]
    adj = jnp.tile(adj1[None], (N_TT, 1, 1))                         # [N_TT, N_CLS, N_ART]

    outs = forward(params, x, x_art, x_task, adj)
    outs = jax.block_until_ready(outs)

    assert len(outs) == 3
    for t, o in zip(TASKS, outs):
        assert o.shape == (B, N_CLS), (t, o.shape)

    # sanity check against a pure-JAX reference (loose tol: bf16/int8 weights,
    # default MXU precision in-kernel vs HIGHEST in the reference)
    refs = reference(params, x, x_art, x_task, adj)
    for o, r in zip(outs, refs):
        assert jnp.allclose(o, r, rtol=5e-2, atol=5e-2), float(jnp.max(jnp.abs(o - r)))

    print("KERNEL_OK")
</pallas_src>

<mosaic_0001>
module attributes {stable_mosaic.version = 11 : i64} {
  func.func @_fused_forward_kernel(%arg0: i32, %arg1: i32, %arg2: memref<12xf32, #tpu.memory_space<smem>>, %arg3: memref<8x128xf32, #tpu.memory_space<vmem>>, %arg4: memref<16x32xf32, #tpu.memory_space<vmem>>, %arg5: memref<1x4x16xf32, #tpu.memory_space<vmem>>, %arg6: memref<1x4x16xf32, #tpu.memory_space<vmem>>, %arg7: memref<1x32x128xbf16, #tpu.memory_space<vmem>>, %arg8: memref<1x16x128xbf16, #tpu.memory_space<vmem>>, %arg9: memref<1x1x128xf32, #tpu.memory_space<vmem>>, %arg10: memref<1x1x128xf32, #tpu.memory_space<vmem>>, %arg11: memref<1x1x128xf32, #tpu.memory_space<vmem>>, %arg12: memref<128x832xbf16, #tpu.memory_space<vmem>>, %arg13: memref<1x1x128x832xi8, #tpu.memory_space<vmem>>, %arg14: memref<1x832xf32, #tpu.memory_space<vmem>>, %arg15: memref<832x12xbf16, #tpu.memory_space<vmem>>, %arg16: memref<1x12xf32, #tpu.memory_space<vmem>>, %arg17: memref<8x12xf32, #tpu.memory_space<vmem>>, %arg18: memref<4x128xf32, #tpu.memory_space<vmem>>, %arg19: memref<1x832xf32, #tpu.memory_space<vmem>>) attributes {dimension_semantics = [#tpu.dimension_semantics<arbitrary>, #tpu.dimension_semantics<arbitrary>], iteration_bounds = array<i64: 3, 4>, scalar_prefetch = 1 : i64, scratch_operands = 2 : i64, tpu.core_type = #tpu.core_type<tc>, window_params = [{pipeline_mode = #tpu.pipeline_mode<synchronous>, transform_indices = @transform_0, window_bounds = array<i64: 8, 128>}, {pipeline_mode = #tpu.pipeline_mode<synchronous>, transform_indices = @transform_1, window_bounds = array<i64: 16, 32>}, {transform_indices = @transform_2, window_bounds = array<i64: 1, 4, 16>}, {transform_indices = @transform_3, window_bounds = array<i64: 1, 4, 16>}, {transform_indices = @transform_4, window_bounds = array<i64: 1, 32, 128>}, {transform_indices = @transform_5, window_bounds = array<i64: 1, 16, 128>}, {transform_indices = @transform_6, window_bounds = array<i64: 1, 1, 128>}, {transform_indices = @transform_7, window_bounds = array<i64: 1, 1, 128>}, {transform_indices = @transform_8, window_bounds = array<i64: 1, 1, 128>}, {pipeline_mode = #tpu.pipeline_mode<synchronous>, transform_indices = @transform_9, window_bounds = array<i64: 128, 832>}, {transform_indices = @transform_10, window_bounds = array<i64: 1, 1, 128, 832>}, {pipeline_mode = #tpu.pipeline_mode<synchronous>, transform_indices = @transform_11, window_bounds = array<i64: 1, 832>}, {pipeline_mode = #tpu.pipeline_mode<synchronous>, transform_indices = @transform_12, window_bounds = array<i64: 832, 12>}, {pipeline_mode = #tpu.pipeline_mode<synchronous>, transform_indices = @transform_13, window_bounds = array<i64: 1, 12>}, {pipeline_mode = #tpu.pipeline_mode<synchronous>, transform_indices = @transform_14, window_bounds = array<i64: 8, 12>}]} {
    %c0_i32 = arith.constant 0 : i32
    %0 = arith.cmpi eq, %arg0, %c0_i32 : i32
    %c0_i32_0 = arith.constant 0 : i32
    %1 = arith.cmpi eq, %arg1, %c0_i32_0 : i32
    %2 = arith.andi %0, %1 : i1
    %3 = arith.extui %2 : i1 to i32
    %c0_i32_1 = arith.constant 0 : i32
    %4 = arith.cmpi ne, %3, %c0_i32_1 : i32
    scf.if %4 {
      %c0_13 = arith.constant 0 : index
      %c0_14 = arith.constant 0 : index
      %28 = vector.load %arg14[%c0_13, %c0_14] : memref<1x832xf32, #tpu.memory_space<vmem>>, vector<1x832xf32>
      %c0_15 = arith.constant 0 : index
      %c0_16 = arith.constant 0 : index
      %29 = vector.load %arg19[%c0_15, %c0_16] : memref<1x832xf32, #tpu.memory_space<vmem>>, vector<1x832xf32>
      tpu.vector_store %arg19[%c0_15, %c0_16], %28 {strides = array<i32>} : memref<1x832xf32, #tpu.memory_space<vmem>>, vector<1x832xf32>,
    } else {
    }
    %c0_i32_2 = arith.constant 0 : i32
    %5 = arith.cmpi eq, %arg1, %c0_i32_2 : i32
    %6 = arith.extui %5 : i1 to i32
    %c0_i32_3 = arith.constant 0 : i32
    %7 = arith.cmpi ne, %6, %c0_i32_3 : i32
    scf.if %7 {
      %c0_13 = arith.constant 0 : index
      %c0_14 = arith.constant 0 : index
      %28 = vector.load %arg4[%c0_13, %c0_14] : memref<16x32xf32, #tpu.memory_space<vmem>>, vector<16x32xf32>
      %29 = arith.truncf %28 : vector<16x32xf32> to vector<16x32xbf16>
      %c0_15 = arith.constant 0 : index
      %c0_16 = arith.constant 0 : index
      %c0_17 = arith.constant 0 : index
      %30 = vector.load %arg7[%c0_15, %c0_16, %c0_17] : memref<1x32x128xbf16, #tpu.memory_space<vmem>>, vector<1x32x128xbf16>
      %31 = vector.shape_cast %30 : vector<1x32x128xbf16> to vector<32x128xbf16>
      %cst_18 = arith.constant dense<0.000000e+00> : vector<16x128xf32>
      %32 = tpu.matmul %29, %31, %cst_18 {dimension_numbers = #tpu.dot_dimension_numbers<[1], [0], [0], [1], [0, 0, 1, 1], [], []>} : vector<16x32xbf16>, vector<32x128xbf16>, vector<16x128xf32> -> vector<16x128xf32>
      %c0_19 = arith.constant 0 : index
      %c0_20 = arith.constant 0 : index
      %c0_21 = arith.constant 0 : index
      %33 = vector.load %arg5[%c0_19, %c0_20, %c0_21] : memref<1x4x16xf32, #tpu.memory_space<vmem>>, vector<1x4x16xf32>
      %34 = vector.shape_cast %33 : vector<1x4x16xf32> to vector<4x16xf32>
      %35 = arith.truncf %34 : vector<4x16xf32> to vector<4x16xbf16>
      %c0_22 = arith.constant 0 : index
      %c0_23 = arith.constant 0 : index
      %c0_24 = arith.constant 0 : index
      %36 = vector.load %arg8[%c0_22, %c0_23, %c0_24] : memref<1x16x128xbf16, #tpu.memory_space<vmem>>, vector<1x16x128xbf16>
      %37 = vector.shape_cast %36 : vector<1x16x128xbf16> to vector<16x128xbf16>
      %cst_25 = arith.constant dense<0.000000e+00> : vector<4x128xf32>
      %38 = tpu.matmul %35, %37, %cst_25 {dimension_numbers = #tpu.dot_dimension_numbers<[1], [0], [0], [1], [0, 0, 1, 1], [], []>} : vector<4x16xbf16>, vector<16x128xbf16>, vector<4x128xf32> -> vector<4x128xf32>
      %c0_26 = arith.constant 0 : index
      %c0_27 = arith.constant 0 : index
      %c0_28 = arith.constant 0 : index
      %39 = vector.load %arg10[%c0_26, %c0_27, %c0_28] : memref<1x1x128xf32, #tpu.memory_space<vmem>>, vector<1x1x128xf32>
      %40 = vector.shape_cast %39 : vector<1x1x128xf32> to vector<1x128xf32>
      %41 = vector.broadcast %40 : vector<1x128xf32> to vector<4x128xf32>
      %42 = arith.mulf %38, %41 : vector<4x128xf32>
      %cst_29 = arith.constant dense<0.000000e+00> : vector<4xf32>
      %43 = vector.multi_reduction <add>, %42, %cst_29 [1] : vector<4x128xf32> to vector<4xf32>
      %44 = vector.shape_cast %43 : vector<4xf32> to vector<4x1xf32>
      %c0_30 = arith.constant 0 : index
      %c0_31 = arith.constant 0 : index
      %c0_32 = arith.constant 0 : index
      %45 = vector.load %arg9[%c0_30, %c0_31, %c0_32] : memref<1x1x128xf32, #tpu.memory_space<vmem>>, vector<1x1x128xf32>
      %46 = vector.shape_cast %45 : vector<1x1x128xf32> to vector<1x128xf32>
      %cst_33 = arith.constant dense<0.000000e+00> : vector<1x16xf32>
      %47 = tpu.matmul %46, %32, %cst_33 {dimension_numbers = #tpu.dot_dimension_numbers<[1], [1], [0], [0], [0, 0, 1, 0], [], []>} : vector<1x128xf32>, vector<16x128xf32>, vector<1x16xf32> -> vector<1x16xf32>
      %48 = vector.broadcast %44 : vector<4x1xf32> to vector<4x16xf32>
      %49 = vector.broadcast %47 : vector<1x16xf32> to vector<4x16xf32>
      %50 = arith.addf %48, %49 : vector<4x16xf32>
      %cst_34 = arith.constant 0.000000e+00 : f32
      %51 = vector.broadcast %cst_34 : f32 to vector<4x16xf32>
      %52 = arith.cmpf ogt, %50, %51 : vector<4x16xf32>
      %cst_35 = arith.constant 2.000000e-01 : f32
      %53 = vector.broadcast %cst_35 : f32 to vector<4x16xf32>
      %54 = arith.mulf %53, %50 : vector<4x16xf32>
      %55 = arith.select %52, %50, %54 : vector<4x16xi1>, vector<4x16xf32>
      %c0_36 = arith.constant 0 : index
      %c0_37 = arith.constant 0 : index
      %c0_38 = arith.constant 0 : index
      %56 = vector.load %arg6[%c0_36, %c0_37, %c0_38] : memref<1x4x16xf32, #tpu.memory_space<vmem>>, vector<1x4x16xf32>
      %57 = vector.shape_cast %56 : vector<1x4x16xf32> to vector<4x16xf32>
      %cst_39 = arith.constant 0.000000e+00 : f32
      %58 = vector.broadcast %cst_39 : f32 to vector<4x16xf32>
      %59 = arith.cmpf ogt, %57, %58 : vector<4x16xf32>
      %cst_40 = arith.constant -1.000000e+30 : f32
      %60 = vector.broadcast %cst_40 : f32 to vector<4x16xf32>
      %61 = arith.select %59, %55, %60 : vector<4x16xi1>, vector<4x16xf32>
      %cst_41 = arith.constant dense<0xFF800000> : vector<4xf32>
      %62 = vector.multi_reduction <maximumf>, %61, %cst_41 [1] : vector<4x16xf32> to vector<4xf32>
      %63 = vector.shape_cast %62 : vector<4xf32> to vector<4x1xf32>
      %cst_42 = arith.constant 0.000000e+00 : f32
      %64 = vector.broadcast %cst_42 : f32 to vector<4x16xf32>
      %65 = arith.cmpf ogt, %57, %64 : vector<4x16xf32>
      %66 = vector.broadcast %63 : vector<4x1xf32> to vector<4x16xf32>
      %67 = arith.subf %61, %66 : vector<4x16xf32>
      %68 = math.exp %67 : vector<4x16xf32>
      %cst_43 = arith.constant 0.000000e+00 : f32
      %69 = vector.broadcast %cst_43 : f32 to vector<4x16xf32>
      %70 = arith.select %65, %68, %69 : vector<4x16xi1>, vector<4x16xf32>
      %cst_44 = arith.constant dense<0.000000e+00> : vector<4xf32>
      %71 = vector.multi_reduction <add>, %70, %cst_44 [1] : vector<4x16xf32> to vector<4xf32>
      %72 = vector.shape_cast %71 : vector<4xf32> to vector<4x1xf32>
      %cst_45 = arith.constant 1.000000e-16 : f32
      %73 = vector.broadcast %cst_45 : f32 to vector<4x1xf32>
      %74 = arith.maximumf %72, %73 : vector<4x1xf32>
      %75 = vector.broadcast %74 : vector<4x1xf32> to vector<4x16xf32>
      %76 = arith.divf %70, %75 : vector<4x16xf32>
      %cst_46 = arith.constant dense<0.000000e+00> : vector<4x128xf32>
      %77 = tpu.matmul %76, %32, %cst_46 {dimension_numbers = #tpu.dot_dimension_numbers<[1], [0], [0], [1], [0, 0, 1, 1], [], []>} : vector<4x16xf32>, vector<16x128xf32>, vector<4x128xf32> -> vector<4x128xf32>
      %c0_47 = arith.constant 0 : index
      %c0_48 = arith.constant 0 : index
      %c0_49 = arith.constant 0 : index
      %78 = vector.load %arg11[%c0_47, %c0_48, %c0_49] : memref<1x1x128xf32, #tpu.memory_space<vmem>>, vector<1x1x128xf32>
      %79 = vector.shape_cast %78 : vector<1x1x128xf32> to vector<1x128xf32>
      %80 = vector.broadcast %79 : vector<1x128xf32> to vector<4x128xf32>
      %81 = arith.addf %77, %80 : vector<4x128xf32>
      %82 = math.tanh %81 : vector<4x128xf32>
      %c0_50 = arith.constant 0 : index
      %c0_51 = arith.constant 0 : index
      %83 = vector.load %arg18[%c0_50, %c0_51] : memref<4x128xf32, #tpu.memory_space<vmem>>, vector<4x128xf32>
      tpu.vector_store %arg18[%c0_50, %c0_51], %82 {strides = array<i32>} : memref<4x128xf32, #tpu.memory_space<vmem>>, vector<4x128xf32>,
    } else {
    }
    %8 = arith.index_cast %arg1 : i32 to index
    %c0 = arith.constant 0 : index
    %9 = vector.load %arg18[%8, %c0] : memref<4x128xf32, #tpu.memory_space<vmem>>, vector<1x128xf32>
    %c0_4 = arith.constant 0 : index
    %c0_5 = arith.constant 0 : index
    %c0_6 = arith.constant 0 : index
    %c0_7 = arith.constant 0 : index
    %10 = vector.load %arg13[%c0_4, %c0_5, %c0_6, %c0_7] : memref<1x1x128x832xi8, #tpu.memory_space<vmem>>, vector<1x1x128x832xi8>
    %11 = vector.shape_cast %10 : vector<1x1x128x832xi8> to vector<128x832xi8>
    %12 = arith.sitofp %11 : vector<128x832xi8> to vector<128x832xf32>
    %cst = arith.constant dense<0.000000e+00> : vector<1x832xf32>
    %13 = tpu.matmul %9, %12, %cst {dimension_numbers = #tpu.dot_dimension_numbers<[1], [0], [0], [1], [0, 0, 1, 1], [], []>} : vector<1x128xf32>, vector<128x832xf32>, vector<1x832xf32> -> vector<1x832xf32>
    %c0_8 = arith.constant 0 : index
    %c0_9 = arith.constant 0 : index
    %14 = vector.load %arg19[%c0_8, %c0_9] : memref<1x832xf32, #tpu.memory_space<vmem>>, vector<1x832xf32>
    %c4_i32 = arith.constant 4 : i32
    %15 = arith.muli %arg0, %c4_i32 : i32
    %16 = arith.addi %15, %arg1 : i32
    %17 = arith.index_cast %16 : i32 to index
    %18 = memref.load %arg2[%17] : memref<12xf32, #tpu.memory_space<smem>>
    %19 = vector.broadcast %18 : f32 to vector<1x832xf32>
    %20 = arith.mulf %13, %19 : vector<1x832xf32>
    %21 = arith.addf %14, %20 : vector<1x832xf32>
    %c0_10 = arith.constant 0 : index
    %c0_11 = arith.constant 0 : index
    %22 = vector.load %arg19[%c0_10, %c0_11] : memref<1x832xf32, #tpu.memory_space<vmem>>, vector<1x832xf32>
    tpu.vector_store %arg19[%c0_10, %c0_11], %21 {strides = array<i32>} : memref<1x832xf32, #tpu.memory_space<vmem>>, vector<1x832xf32>,
    %c2_i32 = arith.constant 2 : i32
    %23 = arith.cmpi eq, %arg0, %c2_i32 : i32
    %c3_i32 = arith.constant 3 : i32
    %24 = arith.cmpi eq, %arg1, %c3_i32 : i32
    %25 = arith.andi %23, %24 : i1
    %26 = arith.extui %25 : i1 to i32
    %c0_i32_12 = arith.constant 0 : i32
    %27 = arith.cmpi ne, %26, %c0_i32_12 : i32
    scf.if %27 {
      %c0_13 = arith.constant 0 : index
      %c0_14 = arith.constant 0 : index
      %28 = vector.load %arg3[%c0_13, %c0_14] : memref<8x128xf32, #tpu.memory_space<vmem>>, vector<8x128xf32>
      %29 = arith.truncf %28 : vector<8x128xf32> to vector<8x128xbf16>
      %c0_15 = arith.constant 0 : index
      %c0_16 = arith.constant 0 : index
      %30 = vector.load %arg12[%c0_15, %c0_16] : memref<128x832xbf16, #tpu.memory_space<vmem>>, vector<128x832xbf16>
      %cst_17 = arith.constant dense<0.000000e+00> : vector<8x832xf32>
      %31 = tpu.matmul %29, %30, %cst_17 {dimension_numbers = #tpu.dot_dimension_numbers<[1], [0], [0], [1], [0, 0, 1, 1], [], []>} : vector<8x128xbf16>, vector<128x832xbf16>, vector<8x832xf32> -> vector<8x832xf32>
      %c0_18 = arith.constant 0 : index
      %c0_19 = arith.constant 0 : index
      %32 = vector.load %arg19[%c0_18, %c0_19] : memref<1x832xf32, #tpu.memory_space<vmem>>, vector<1x832xf32>
      %33 = vector.broadcast %32 : vector<1x832xf32> to vector<8x832xf32>
      %34 = arith.addf %31, %33 : vector<8x832xf32>
      %cst_20 = arith.constant 0.000000e+00 : f32
      %35 = vector.broadcast %cst_20 : f32 to vector<8x832xf32>
      %36 = arith.maximumf %34, %35 : vector<8x832xf32>
      %37 = arith.truncf %36 : vector<8x832xf32> to vector<8x832xbf16>
      %c0_21 = arith.constant 0 : index
      %c0_22 = arith.constant 0 : index
      %38 = vector.load %arg15[%c0_21, %c0_22] : memref<832x12xbf16, #tpu.memory_space<vmem>>, vector<832x12xbf16>
      %cst_23 = arith.constant dense<0.000000e+00> : vector<8x12xf32>
      %39 = tpu.matmul %37, %38, %cst_23 {dimension_numbers = #tpu.dot_dimension_numbers<[1], [0], [0], [1], [0, 0, 1, 1], [], []>} : vector<8x832xbf16>, vector<832x12xbf16>, vector<8x12xf32> -> vector<8x12xf32>
      %c0_24 = arith.constant 0 : index
      %c0_25 = arith.constant 0 : index
      %40 = vector.load %arg16[%c0_24, %c0_25] : memref<1x12xf32, #tpu.memory_space<vmem>>, vector<1x12xf32>
      %41 = vector.broadcast %40 : vector<1x12xf32> to vector<8x12xf32>
      %42 = arith.addf %39, %41 : vector<8x12xf32>
      %c0_26 = arith.constant 0 : index
      %c0_27 = arith.constant 0 : index
      %43 = vector.load %arg17[%c0_26, %c0_27] : memref<8x12xf32, #tpu.memory_space<vmem>>, vector<8x12xf32>
      tpu.vector_store %arg17[%c0_26, %c0_27], %42 {strides = array<i32>} : memref<8x12xf32, #tpu.memory_space<vmem>>, vector<8x12xf32>,
    } else {
    }
    return
  }
  func.func @transform_0(%arg0: i32, %arg1: i32, %arg2: memref<12xf32, #tpu.memory_space<smem>>) -> (i32, i32) {
    %c0_i32 = arith.constant 0 : i32
    %c0_i32_0 = arith.constant 0 : i32
    %c0_i32_1 = arith.constant 0 : i32
    return %c0_i32, %c0_i32_0 : i32, i32
  }
  func.func @transform_1(%arg0: i32, %arg1: i32, %arg2: memref<12xf32, #tpu.memory_space<smem>>) -> (i32, i32) {
    %c0_i32 = arith.constant 0 : i32
    %c0_i32_0 = arith.constant 0 : i32
    %c0_i32_1 = arith.constant 0 : i32
    return %c0_i32, %c0_i32_0 : i32, i32
  }
  func.func @transform_2(%arg0: i32, %arg1: i32, %arg2: memref<12xf32, #tpu.memory_space<smem>>) -> (i32, i32, i32) {
    %c0_i32 = arith.constant 0 : i32
    %c0_i32_0 = arith.constant 0 : i32
    %c0_i32_1 = arith.constant 0 : i32
    return %arg0, %c0_i32, %c0_i32_0 : i32, i32, i32
  }
  func.func @transform_3(%arg0: i32, %arg1: i32, %arg2: memref<12xf32, #tpu.memory_space<smem>>) -> (i32, i32, i32) {
    %c0_i32 = arith.constant 0 : i32
    %c0_i32_0 = arith.constant 0 : i32
    %c0_i32_1 = arith.constant 0 : i32
    return %arg0, %c0_i32, %c0_i32_0 : i32, i32, i32
  }
  func.func @transform_4(%arg0: i32, %arg1: i32, %arg2: memref<12xf32, #tpu.memory_space<smem>>) -> (i32, i32, i32) {
    %c0_i32 = arith.constant 0 : i32
    %c0_i32_0 = arith.constant 0 : i32
    %c0_i32_1 = arith.constant 0 : i32
    return %arg0, %c0_i32, %c0_i32_0 : i32, i32, i32
  }
  func.func @transform_5(%arg0: i32, %arg1: i32, %arg2: memref<12xf32, #tpu.memory_space<smem>>) -> (i32, i32, i32) {
    %c0_i32 = arith.constant 0 : i32
    %c0_i32_0 = arith.constant 0 : i32
    %c0_i32_1 = arith.constant 0 : i32
    return %arg0, %c0_i32, %c0_i32_0 : i32, i32, i32
  }
  func.func @transform_6(%arg0: i32, %arg1: i32, %arg2: memref<12xf32, #tpu.memory_space<smem>>) -> (i32, i32, i32) {
    %c0_i32 = arith.constant 0 : i32
    %c0_i32_0 = arith.constant 0 : i32
    %c0_i32_1 = arith.constant 0 : i32
    return %arg0, %c0_i32, %c0_i32_0 : i32, i32, i32
  }
  func.func @transform_7(%arg0: i32, %arg1: i32, %arg2: memref<12xf32, #tpu.memory_space<smem>>) -> (i32, i32, i32) {
    %c0_i32 = arith.constant 0 : i32
    %c0_i32_0 = arith.constant 0 : i32
    %c0_i32_1 = arith.constant 0 : i32
    return %arg0, %c0_i32, %c0_i32_0 : i32, i32, i32
  }
  func.func @transform_8(%arg0: i32, %arg1: i32, %arg2: memref<12xf32, #tpu.memory_space<smem>>) -> (i32, i32, i32) {
    %c0_i32 = arith.constant 0 : i32
    %c0_i32_0 = arith.constant 0 : i32
    %c0_i32_1 = arith.constant 0 : i32
    return %arg0, %c0_i32, %c0_i32_0 : i32, i32, i32
  }
  func.func @transform_9(%arg0: i32, %arg1: i32, %arg2: memref<12xf32, #tpu.memory_space<smem>>) -> (i32, i32) {
    %c0_i32 = arith.constant 0 : i32
    %c0_i32_0 = arith.constant 0 : i32
    %c0_i32_1 = arith.constant 0 : i32
    return %c0_i32, %c0_i32_0 : i32, i32
  }
  func.func @transform_10(%arg0: i32, %arg1: i32, %arg2: memref<12xf32, #tpu.memory_space<smem>>) -> (i32, i32, i32, i32) {
    %c0_i32 = arith.constant 0 : i32
    %c0_i32_0 = arith.constant 0 : i32
    %c0_i32_1 = arith.constant 0 : i32
    return %arg0, %arg1, %c0_i32, %c0_i32_0 : i32, i32, i32, i32
  }
  func.func @transform_11(%arg0: i32, %arg1: i32, %arg2: memref<12xf32, #tpu.memory_space<smem>>) -> (i32, i32) {
    %c0_i32 = arith.constant 0 : i32
    %c0_i32_0 = arith.constant 0 : i32
    %c0_i32_1 = arith.constant 0 : i32
    return %c0_i32, %c0_i32_0 : i32, i32
  }
  func.func @transform_12(%arg0: i32, %arg1: i32, %arg2: memref<12xf32, #tpu.memory_space<smem>>) -> (i32, i32) {
    %c0_i32 = arith.constant 0 : i32
    %c0_i32_0 = arith.constant 0 : i32
    %c0_i32_1 = arith.constant 0 : i32
    return %c0_i32, %c0_i32_0 : i32, i32
  }
  func.func @transform_13(%arg0: i32, %arg1: i32, %arg2: memref<12xf32, #tpu.memory_space<smem>>) -> (i32, i32) {
    %c0_i32 = arith.constant 0 : i32
    %c0_i32_0 = arith.constant 0 : i32
    %c0_i32_1 = arith.constant 0 : i32
    return %c0_i32, %c0_i32_0 : i32, i32
  }
  func.func @transform_14(%arg0: i32, %arg1: i32, %arg2: memref<12xf32, #tpu.memory_space<smem>>) -> (i32, i32) {
    %c0_i32 = arith.constant 0 : i32
    %c0_i32_0 = arith.constant 0 : i32
    %c0_i32_1 = arith.constant 0 : i32
    return %c0_i32, %c0_i32_0 : i32, i32
  }
}

</mosaic_0001>

<llo_original>
// kernel: tpu_custom_call.1
$region0: #{tpu_custom_call.1}
  #allocation0 [shape = 'u32[]', space=smem, size = 0x4, offset = 0x4, fixed_abs, tag = 'smem constant byte address 0x4 - core index']
  #allocation1 [shape = 'u32[144,128]{1,0:T(1,128)}', space=vmem, size = 0x12000, scoped, tag = 'internal scratch']
  #allocation2 [shape = 'f32[4,128]{1,0:T(4,128)}', space=vmem, size = 0x800, scoped, tag = 'scratch operand']
  #allocation3 [shape = 'f32[1,832]{1,0:T(1,128)}', space=vmem, size = 0xe00, scoped, tag = 'scratch operand']
  #allocation4 [shape = 's32[1]{0}', space=sflag, size = 0x4, scoped, tag = 'scoped memory for tpu_custom_call.1']
  #allocation5 [shape = 'u8[512]{0}', space=smem, size = 0x200, scoped, tag = 'prefetched SMEM operand 0']
  %s0 = inlined_call_operand.vmem [shape: f32[12], index: 0, kind: input, shape index: {}]
  %s1 = inlined_call_operand.vmem [shape: f32[8,128], index: 1, kind: input, shape index: {}]
  %s2 = inlined_call_operand.vmem [shape: f32[16,32], index: 2, kind: input, shape index: {}]
  %s3 = inlined_call_operand.vmem [shape: f32[3,4,16], index: 3, kind: input, shape index: {}]
  %s4 = inlined_call_operand.vmem [shape: f32[3,4,16], index: 4, kind: input, shape index: {}]
  %s5 = inlined_call_operand.vmem [shape: bf16[3,32,128], index: 5, kind: input, shape index: {}]
  %s6 = inlined_call_operand.vmem [shape: bf16[3,16,128], index: 6, kind: input, shape index: {}]
  %s7 = inlined_call_operand.vmem [shape: f32[3,1,128], index: 7, kind: input, shape index: {}]
  %s8 = inlined_call_operand.vmem [shape: f32[3,1,128], index: 8, kind: input, shape index: {}]
  %s9 = inlined_call_operand.vmem [shape: f32[3,1,128], index: 9, kind: input, shape index: {}]
  %s10 = inlined_call_operand.vmem [shape: bf16[128,832], index: 10, kind: input, shape index: {}]
  %s11 = inlined_call_operand.vmem [shape: s8[3,4,128,832], index: 11, kind: input, shape index: {}]
  %s12 = inlined_call_operand.vmem [shape: f32[1,832], index: 12, kind: input, shape index: {}]
  %s13 = inlined_call_operand.vmem [shape: bf16[832,12], index: 13, kind: input, shape index: {}]
  %s14 = inlined_call_operand.vmem [shape: f32[1,12], index: 14, kind: input, shape index: {}]
  %s15 = inlined_call_operand.hbm [shape: f32[8,12], index: 15, kind: output, shape index: {}]
  %s16 = sld [smem:[#allocation0]]
  $region101: #{tpu_custom_call.1} parent=0
    _
  %s18 = ssub.s32 1, %s16
  %s19 = scalar_select 0, %s18, %s16
  %s20 = sshll.u32 %s0, 4
  %s21 = int_to_ptr.vmem [resolvable:$true] %s20
  %23 = dma.vmem_to_smem %s21, 16, [#allocation5], [#allocation4]
  %24 = dma.done [#allocation4], 16
  %25 = sfence
  $region1: #{tpu_custom_call.1} parent=0
    #allocation6 [shape = 'u8[4096]{0}', space=vmem, size = 0x1000, scoped, tag = 'output window, operand 0, single buffered']
    #allocation7 [shape = 's32[2]{0}', space=sflag, size = 0x8, scoped, tag = 'scoped memory for tpu_custom_call.1']
    %26 = vsyncpa [#allocation7], 0
    loop: start=0, step=1, limit=14
    $region2: #{tpu_custom_call.1} parent=1 // loop_pre_header
      _
    $region3: #{tpu_custom_call.1} parent=1 // loop_header
      %s28 = sphi 0, %s32
      %p29 = scmp.ge.s32.totalorder %s28, 14
      %s35 = sphi 0, %s47
      %s36 = sphi 0, %s43
      %s37 = sphi 0, %s35
      %s38 = sphi 0, %s36
      %s39 = sphi 0, %s37
      %s40 = sphi 0, %s38
      %s48 = sphi 0, %s48
      %s50 = sphi 0, %s48
      %s51 = sphi 0, %s50
      %s65 = sphi 0, %s51
      %s69 = sphi 0, %s69
      %s71 = sphi 0, %s69
      %s72 = sphi 0, %s71
      %s86 = sphi 0, %s72
      %s92 = sphi 0, %s94
      %s95 = sphi 0, %s92
      %s96 = sphi 0, %s95
      %s112 = sphi 0, %s96
      %s118 = sphi 0, %s120
      %s121 = sphi 0, %s118
      %s122 = sphi 0, %s121
      %s138 = sphi 0, %s122
      %s144 = sphi 0, %s146
      %s147 = sphi 0, %s144
      %s148 = sphi 0, %s147
      %s164 = sphi 0, %s148
      %s170 = sphi 0, %s172
      %s173 = sphi 0, %s170
      %s174 = sphi 0, %s173
      %s190 = sphi 0, %s174
      %s196 = sphi 0, %s198
      %s199 = sphi 0, %s196
      %s200 = sphi 0, %s199
      %s216 = sphi 0, %s200
      %s222 = sphi 0, %s224
      %s225 = sphi 0, %s222
      %s226 = sphi 0, %s225
      %s242 = sphi 0, %s226
      %s248 = sphi 0, %s250
      %s251 = sphi 0, %s248
      %s252 = sphi 0, %s251
      %s268 = sphi 0, %s252
      %s272 = sphi 0, %s272
      %s274 = sphi 0, %s272
      %s275 = sphi 0, %s274
      %s289 = sphi 0, %s275
      %s297 = sphi 0, %s299
      %s300 = sphi 0, %s297
      %s301 = sphi 0, %s300
      %s317 = sphi 0, %s301
      %s321 = sphi 0, %s321
      %s323 = sphi 0, %s321
      %s324 = sphi 0, %s323
      %s338 = sphi 0, %s324
      %s342 = sphi 0, %s342
      %s344 = sphi 0, %s342
      %s345 = sphi 0, %s344
      %s359 = sphi 0, %s345
      %s363 = sphi 0, %s363
      %s365 = sphi 0, %s363
      %s366 = sphi 0, %s365
      %s380 = sphi 0, %s366
      %s384 = sphi 0, %s384
      %s386 = sphi 0, %s384
      %s387 = sphi 0, %s386
      %s401 = sphi 0, %s387
    $region4: #{tpu_custom_call.1} parent=1 // loop_header_branch
      %31 = sbr.rel (%p29) target = $region8
    $region5: #{tpu_custom_call.1} parent=1 // loop_body
      %s33 = ssub.s32 %s28, 1
      %s34 = ssub.s32 %s28, 2
      %s41 = sadd.s32 1, %s36
      %p42 = scmp.ge.s32.totalorder %s41, 4
      %s43 = scalar_select %p42, 0, %s41
      %s44 = sadd.s32 1, %s35
      %s45 = scalar_select %p42, %s44, %s35
      %p46 = scmp.ge.s32.totalorder %s45, 3
      %s47 = scalar_select %p46, 0, %s45
      %s49 = sadd.s32 %s48, 1
      %p52 = scmp.eq.s32.totalorder %s28, 11
      %p53 = scmp.ne.s32.totalorder %s48, %s50
      %p54 = scmp.eq.s32.totalorder %s28, 0
      %p55 = por %p53, %p54
      %p56 = scmp.ne.s32.totalorder %s48, %s50
      %p57 = scmp.eq.s32.totalorder %s33, 11
      %p58 = por %p56, %p57
      %p59 = scmp.ne.s32.totalorder %s50, %s51
      %p60 = scmp.eq.s32.totalorder %s33, 0
      %p61 = por %p59, %p60
      %p62 = scmp.ne.s32.totalorder %s50, %s51
      %p63 = scmp.eq.s32.totalorder %s34, 11
      %p64 = por %p62, %p63
      %p66 = scmp.ne.s32.totalorder %s51, %s65
      %p67 = scmp.eq.s32.totalorder %s34, 0
      %p68 = por %p66, %p67
      %s70 = sadd.s32 %s69, 1
      %p73 = scmp.eq.s32.totalorder %s28, 11
      %p74 = scmp.ne.s32.totalorder %s69, %s71
      %p75 = scmp.eq.s32.totalorder %s28, 0
      %p76 = por %p74, %p75
      %p77 = scmp.ne.s32.totalorder %s69, %s71
      %p78 = scmp.eq.s32.totalorder %s33, 11
      %p79 = por %p77, %p78
      %p80 = scmp.ne.s32.totalorder %s71, %s72
      %p81 = scmp.eq.s32.totalorder %s33, 0
      %p82 = por %p80, %p81
      %p83 = scmp.ne.s32.totalorder %s71, %s72
      %p84 = scmp.eq.s32.totalorder %s34, 11
      %p85 = por %p83, %p84
      %p87 = scmp.ne.s32.totalorder %s72, %s86
      %p88 = scmp.eq.s32.totalorder %s34, 0
      %p89 = por %p87, %p88
      %s90 = ssub.s32 %s35, %s47
      %p91 = scmp.eq.s32.totalorder %s90, 0
      %s93 = sadd.s32 %s92, 1
      %s94 = scalar_select %p91, %s92, %s93
      %p97 = pneg %p91
      %p98 = scmp.eq.s32.totalorder %s28, 11
      %p99 = por %p97, %p98
      %p100 = scmp.ne.s32.totalorder %s92, %s95
      %p101 = scmp.eq.s32.totalorder %s28, 0
      %p102 = por %p100, %p101
      %p103 = scmp.ne.s32.totalorder %s92, %s95
      %p104 = scmp.eq.s32.totalorder %s33, 11
      %p105 = por %p103, %p104
      %p106 = scmp.ne.s32.totalorder %s95, %s96
      %p107 = scmp.eq.s32.totalorder %s33, 0
      %p108 = por %p106, %p107
      %p109 = scmp.ne.s32.totalorder %s95, %s96
      %p110 = scmp.eq.s32.totalorder %s34, 11
      %p111 = por %p109, %p110
      %p113 = scmp.ne.s32.totalorder %s96, %s112
      %p114 = scmp.eq.s32.totalorder %s34, 0
      %p115 = por %p113, %p114
      %s116 = ssub.s32 %s35, %s47
      %p117 = scmp.eq.s32.totalorder %s116, 0
      %s119 = sadd.s32 %s118, 1
      %s120 = scalar_select %p117, %s118, %s119
      %p123 = pneg %p117
      %p124 = scmp.eq.s32.totalorder %s28, 11
      %p125 = por %p123, %p124
      %p126 = scmp.ne.s32.totalorder %s118, %s121
      %p127 = scmp.eq.s32.totalorder %s28, 0
      %p128 = por %p126, %p127
      %p129 = scmp.ne.s32.totalorder %s118, %s121
      %p130 = scmp.eq.s32.totalorder %s33, 11
      %p131 = por %p129, %p130
      %p132 = scmp.ne.s32.totalorder %s121, %s122
      %p133 = scmp.eq.s32.totalorder %s33, 0
      %p134 = por %p132, %p133
      %p135 = scmp.ne.s32.totalorder %s121, %s122
      %p136 = scmp.eq.s32.totalorder %s34, 11
      %p137 = por %p135, %p136
      %p139 = scmp.ne.s32.totalorder %s122, %s138
      %p140 = scmp.eq.s32.totalorder %s34, 0
      %p141 = por %p139, %p140
      %s142 = ssub.s32 %s35, %s47
      %p143 = scmp.eq.s32.totalorder %s142, 0
      %s145 = sadd.s32 %s144, 1
      %s146 = scalar_select %p143, %s144, %s145
      %p149 = pneg %p143
      %p150 = scmp.eq.s32.totalorder %s28, 11
      %p151 = por %p149, %p150
      %p152 = scmp.ne.s32.totalorder %s144, %s147
      %p153 = scmp.eq.s32.totalorder %s28, 0
      %p154 = por %p152, %p153
      %p155 = scmp.ne.s32.totalorder %s144, %s147
      %p156 = scmp.eq.s32.totalorder %s33, 11
      %p157 = por %p155, %p156
      %p158 = scmp.ne.s32.totalorder %s147, %s148
      %p159 = scmp.eq.s32.totalorder %s33, 0
      %p160 = por %p158, %p159
      %p161 = scmp.ne.s32.totalorder %s147, %s148
      %p162 = scmp.eq.s32.totalorder %s34, 11
      %p163 = por %p161, %p162
      %p165 = scmp.ne.s32.totalorder %s148, %s164
      %p166 = scmp.eq.s32.totalorder %s34, 0
      %p167 = por %p165, %p166
      %s168 = ssub.s32 %s35, %s47
      %p169 = scmp.eq.s32.totalorder %s168, 0
      %s171 = sadd.s32 %s170, 1
      %s172 = scalar_select %p169, %s170, %s171
      %p175 = pneg %p169
      %p176 = scmp.eq.s32.totalorder %s28, 11
      %p177 = por %p175, %p176
      %p178 = scmp.ne.s32.totalorder %s170, %s173
      %p179 = scmp.eq.s32.totalorder %s28, 0
      %p180 = por %p178, %p179
      %p181 = scmp.ne.s32.totalorder %s170, %s173
      %p182 = scmp.eq.s32.totalorder %s33, 11
      %p183 = por %p181, %p182
      %p184 = scmp.ne.s32.totalorder %s173, %s174
      %p185 = scmp.eq.s32.totalorder %s33, 0
      %p186 = por %p184, %p185
      %p187 = scmp.ne.s32.totalorder %s173, %s174
      %p188 = scmp.eq.s32.totalorder %s34, 11
      %p189 = por %p187, %p188
      %p191 = scmp.ne.s32.totalorder %s174, %s190
      %p192 = scmp.eq.s32.totalorder %s34, 0
      %p193 = por %p191, %p192
      %s194 = ssub.s32 %s35, %s47
      %p195 = scmp.eq.s32.totalorder %s194, 0
      %s197 = sadd.s32 %s196, 1
      %s198 = scalar_select %p195, %s196, %s197
      %p201 = pneg %p195
      %p202 = scmp.eq.s32.totalorder %s28, 11
      %p203 = por %p201, %p202
      %p204 = scmp.ne.s32.totalorder %s196, %s199
      %p205 = scmp.eq.s32.totalorder %s28, 0
      %p206 = por %p204, %p205
      %p207 = scmp.ne.s32.totalorder %s196, %s199
      %p208 = scmp.eq.s32.totalorder %s33, 11
      %p209 = por %p207, %p208
      %p210 = scmp.ne.s32.totalorder %s199, %s200
      %p211 = scmp.eq.s32.totalorder %s33, 0
      %p212 = por %p210, %p211
      %p213 = scmp.ne.s32.totalorder %s199, %s200
      %p214 = scmp.eq.s32.totalorder %s34, 11
      %p215 = por %p213, %p214
      %p217 = scmp.ne.s32.totalorder %s200, %s216
      %p218 = scmp.eq.s32.totalorder %s34, 0
      %p219 = por %p217, %p218
      %s220 = ssub.s32 %s35, %s47
      %p221 = scmp.eq.s32.totalorder %s220, 0
      %s223 = sadd.s32 %s222, 1
      %s224 = scalar_select %p221, %s222, %s223
      %p227 = pneg %p221
      %p228 = scmp.eq.s32.totalorder %s28, 11
      %p229 = por %p227, %p228
      %p230 = scmp.ne.s32.totalorder %s222, %s225
      %p231 = scmp.eq.s32.totalorder %s28, 0
      %p232 = por %p230, %p231
      %p233 = scmp.ne.s32.totalorder %s222, %s225
      %p234 = scmp.eq.s32.totalorder %s33, 11
      %p235 = por %p233, %p234
      %p236 = scmp.ne.s32.totalorder %s225, %s226
      %p237 = scmp.eq.s32.totalorder %s33, 0
      %p238 = por %p236, %p237
      %p239 = scmp.ne.s32.totalorder %s225, %s226
      %p240 = scmp.eq.s32.totalorder %s34, 11
      %p241 = por %p239, %p240
      %p243 = scmp.ne.s32.totalorder %s226, %s242
      %p244 = scmp.eq.s32.totalorder %s34, 0
      %p245 = por %p243, %p244
      %s246 = ssub.s32 %s35, %s47
      %p247 = scmp.eq.s32.totalorder %s246, 0
      %s249 = sadd.s32 %s248, 1
      %s250 = scalar_select %p247, %s248, %s249
      %p253 = pneg %p247
      %p254 = scmp.eq.s32.totalorder %s28, 11
      %p255 = por %p253, %p254
      %p256 = scmp.ne.s32.totalorder %s248, %s251
      %p257 = scmp.eq.s32.totalorder %s28, 0
      %p258 = por %p256, %p257
      %p259 = scmp.ne.s32.totalorder %s248, %s251
      %p260 = scmp.eq.s32.totalorder %s33, 11
      %p261 = por %p259, %p260
      %p262 = scmp.ne.s32.totalorder %s251, %s252
      %p263 = scmp.eq.s32.totalorder %s33, 0
      %p264 = por %p262, %p263
      %p265 = scmp.ne.s32.totalorder %s251, %s252
      %p266 = scmp.eq.s32.totalorder %s34, 11
      %p267 = por %p265, %p266
      %p269 = scmp.ne.s32.totalorder %s252, %s268
      %p270 = scmp.eq.s32.totalorder %s34, 0
      %p271 = por %p269, %p270
      %s273 = sadd.s32 %s272, 1
      %p276 = scmp.eq.s32.totalorder %s28, 11
      %p277 = scmp.ne.s32.totalorder %s272, %s274
      %p278 = scmp.eq.s32.totalorder %s28, 0
      %p279 = por %p277, %p278
      %p280 = scmp.ne.s32.totalorder %s272, %s274
      %p281 = scmp.eq.s32.totalorder %s33, 11
      %p282 = por %p280, %p281
      %p283 = scmp.ne.s32.totalorder %s274, %s275
      %p284 = scmp.eq.s32.totalorder %s33, 0
      %p285 = por %p283, %p284
      %p286 = scmp.ne.s32.totalorder %s274, %s275
      %p287 = scmp.eq.s32.totalorder %s34, 11
      %p288 = por %p286, %p287
      %p290 = scmp.ne.s32.totalorder %s275, %s289
      %p291 = scmp.eq.s32.totalorder %s34, 0
      %p292 = por %p290, %p291
      %s293 = ssub.s32 %s35, %s47
      %s294 = ssub.s32 %s36, %s43
      %s295 = sor.u32 %s293, %s294
      %p296 = scmp.eq.s32.totalorder %s295, 0
      %s298 = sadd.s32 %s297, 1
      %s299 = scalar_select %p296, %s297, %s298
      %p302 = pneg %p296
      %p303 = scmp.eq.s32.totalorder %s28, 11
      %p304 = por %p302, %p303
      %p305 = scmp.ne.s32.totalorder %s297, %s300
      %p306 = scmp.eq.s32.totalorder %s28, 0
      %p307 = por %p305, %p306
      %p308 = scmp.ne.s32.totalorder %s297, %s300
      %p309 = scmp.eq.s32.totalorder %s33, 11
      %p310 = por %p308, %p309
      %p311 = scmp.ne.s32.totalorder %s300, %s301
      %p312 = scmp.eq.s32.totalorder %s33, 0
      %p313 = por %p311, %p312
      %p314 = scmp.ne.s32.totalorder %s300, %s301
      %p315 = scmp.eq.s32.totalorder %s34, 11
      %p316 = por %p314, %p315
      %p318 = scmp.ne.s32.totalorder %s301, %s317
      %p319 = scmp.eq.s32.totalorder %s34, 0
      %p320 = por %p318, %p319
      %s322 = sadd.s32 %s321, 1
      %p325 = scmp.eq.s32.totalorder %s28, 11
      %p326 = scmp.ne.s32.totalorder %s321, %s323
      %p327 = scmp.eq.s32.totalorder %s28, 0
      %p328 = por %p326, %p327
      %p329 = scmp.ne.s32.totalorder %s321, %s323
      %p330 = scmp.eq.s32.totalorder %s33, 11
      %p331 = por %p329, %p330
      %p332 = scmp.ne.s32.totalorder %s323, %s324
      %p333 = scmp.eq.s32.totalorder %s33, 0
      %p334 = por %p332, %p333
      %p335 = scmp.ne.s32.totalorder %s323, %s324
      %p336 = scmp.eq.s32.totalorder %s34, 11
      %p337 = por %p335, %p336
      %p339 = scmp.ne.s32.totalorder %s324, %s338
      %p340 = scmp.eq.s32.totalorder %s34, 0
      %p341 = por %p339, %p340
      %s343 = sadd.s32 %s342, 1
      %p346 = scmp.eq.s32.totalorder %s28, 11
      %p347 = scmp.ne.s32.totalorder %s342, %s344
      %p348 = scmp.eq.s32.totalorder %s28, 0
      %p349 = por %p347, %p348
      %p350 = scmp.ne.s32.totalorder %s342, %s344
      %p351 = scmp.eq.s32.totalorder %s33, 11
      %p352 = por %p350, %p351
      %p353 = scmp.ne.s32.totalorder %s344, %s345
      %p354 = scmp.eq.s32.totalorder %s33, 0
      %p355 = por %p353, %p354
      %p356 = scmp.ne.s32.totalorder %s344, %s345
      %p357 = scmp.eq.s32.totalorder %s34, 11
      %p358 = por %p356, %p357
      %p360 = scmp.ne.s32.totalorder %s345, %s359
      %p361 = scmp.eq.s32.totalorder %s34, 0
      %p362 = por %p360, %p361
      %s364 = sadd.s32 %s363, 1
      %p367 = scmp.eq.s32.totalorder %s28, 11
      %p368 = scmp.ne.s32.totalorder %s363, %s365
      %p369 = scmp.eq.s32.totalorder %s28, 0
      %p370 = por %p368, %p369
      %p371 = scmp.ne.s32.totalorder %s363, %s365
      %p372 = scmp.eq.s32.totalorder %s33, 11
      %p373 = por %p371, %p372
      %p374 = scmp.ne.s32.totalorder %s365, %s366
      %p375 = scmp.eq.s32.totalorder %s33, 0
      %p376 = por %p374, %p375
      %p377 = scmp.ne.s32.totalorder %s365, %s366
      %p378 = scmp.eq.s32.totalorder %s34, 11
      %p379 = por %p377, %p378
      %p381 = scmp.ne.s32.totalorder %s366, %s380
      %p382 = scmp.eq.s32.totalorder %s34, 0
      %p383 = por %p381, %p382
      %s385 = sadd.s32 %s384, 1
      %p388 = scmp.eq.s32.totalorder %s28, 11
      %p389 = scmp.ne.s32.totalorder %s384, %s386
      %p390 = scmp.eq.s32.totalorder %s28, 0
      %p391 = por %p389, %p390
      %p392 = scmp.ne.s32.totalorder %s384, %s386
      %p393 = scmp.eq.s32.totalorder %s33, 11
      %p394 = por %p392, %p393
      %p395 = scmp.ne.s32.totalorder %s386, %s387
      %p396 = scmp.eq.s32.totalorder %s33, 0
      %p397 = por %p395, %p396
      %p398 = scmp.ne.s32.totalorder %s386, %s387
      %p399 = scmp.eq.s32.totalorder %s34, 11
      %p400 = por %p398, %p399
      %p402 = scmp.ne.s32.totalorder %s387, %s401
      %p403 = scmp.eq.s32.totalorder %s34, 0
      %p404 = por %p402, %p403
      %p405 = scmp.le.s32.totalorder 1, %s28
      %p406 = scmp.lt.s32.totalorder %s28, 13
      %p407 = pnand %p405, %p406
      %p408 = pneg %p407
      // Predicated region
      $region9: #{tpu_custom_call.1} parent=5 // pred_check
        _
      $region10: #{tpu_custom_call.1} parent=5 // pred_check_branch
        %410 = sbr.rel (%p407) target = $region12
      $region11: #{tpu_custom_call.1} parent=5 // pred_region
        %s411 = ssub.s32 %s28, 1
        // Predicated region
        $region13: #{tpu_custom_call.1} parent=11 // pred_check
          %p412 = pneg %p61
        $region14: #{tpu_custom_call.1} parent=11 // pred_check_branch
          %414 = sbr.rel (%p412) target = $region16
        $region15: #{tpu_custom_call.1} parent=11 // pred_region
          _
        $region16: #{tpu_custom_call.1} parent=11 // pred_fallthru
          _
        // Predicated region
        $region17: #{tpu_custom_call.1} parent=11 // pred_check
          %p415 = pneg %p82
        $region18: #{tpu_custom_call.1} parent=11 // pred_check_branch
          %417 = sbr.rel (%p415) target = $region20
        $region19: #{tpu_custom_call.1} parent=11 // pred_region
          _
        $region20: #{tpu_custom_call.1} parent=11 // pred_fallthru
          _
        // Predicated region
        $region21: #{tpu_custom_call.1} parent=11 // pred_check
          %p418 = pneg %p285
        $region22: #{tpu_custom_call.1} parent=11 // pred_check_branch
          %420 = sbr.rel (%p418) target = $region24
        $region23: #{tpu_custom_call.1} parent=11 // pred_region
          _
        $region24: #{tpu_custom_call.1} parent=11 // pred_fallthru
          _
        // Predicated region
        $region25: #{tpu_custom_call.1} parent=11 // pred_check
          %p421 = pneg %p334
        $region26: #{tpu_custom_call.1} parent=11 // pred_check_branch
          %423 = sbr.rel (%p421) target = $region28
        $region27: #{tpu_custom_call.1} parent=11 // pred_region
          _
        $region28: #{tpu_custom_call.1} parent=11 // pred_fallthru
          _
        // Predicated region
        $region29: #{tpu_custom_call.1} parent=11 // pred_check
          %p424 = pneg %p355
        $region30: #{tpu_custom_call.1} parent=11 // pred_check_branch
          %426 = sbr.rel (%p424) target = $region32
        $region31: #{tpu_custom_call.1} parent=11 // pred_region
          _
        $region32: #{tpu_custom_call.1} parent=11 // pred_fallthru
          _
        // Predicated region
        $region33: #{tpu_custom_call.1} parent=11 // pred_check
          %p427 = pneg %p376
        $region34: #{tpu_custom_call.1} parent=11 // pred_check_branch
          %429 = sbr.rel (%p427) target = $region36
        $region35: #{tpu_custom_call.1} parent=11 // pred_region
          _
        $region36: #{tpu_custom_call.1} parent=11 // pred_fallthru
          _
      $region12: #{tpu_custom_call.1} parent=5 // pred_fallthru
        _
      %p430 = scmp.lt.s32.totalorder %s28, 12
      // Predicated region
      $region37: #{tpu_custom_call.1} parent=5 // pred_check
        %p431 = pneg %p430
      $region38: #{tpu_custom_call.1} parent=5 // pred_check_branch
        %433 = sbr.rel (%p431) target = $region40
      $region39: #{tpu_custom_call.1} parent=5 // pred_region
        // Predicated region
        $region41: #{tpu_custom_call.1} parent=39 // pred_check
          %p434 = pneg %p102
        $region42: #{tpu_custom_call.1} parent=39 // pred_check_branch
          %436 = sbr.rel (%p434) target = $region44
        $region43: #{tpu_custom_call.1} parent=39 // pred_region
          %p437 = scmp.lt.s32.totalorder %s35, 2
          %s438 = scalar_select %p437, %s35, 2
          %s439 = smul.addr %s438, 4
          %s440 = scalar_lea.vmem %s3, %s439
        $region44: #{tpu_custom_call.1} parent=39 // pred_fallthru
          _
        // Predicated region
        $region45: #{tpu_custom_call.1} parent=39 // pred_check
          %p441 = pneg %p128
        $region46: #{tpu_custom_call.1} parent=39 // pred_check_branch
          %443 = sbr.rel (%p441) target = $region48
        $region47: #{tpu_custom_call.1} parent=39 // pred_region
          %p444 = scmp.lt.s32.totalorder %s35, 2
          %s445 = scalar_select %p444, %s35, 2
          %s446 = smul.addr %s445, 4
          %s447 = scalar_lea.vmem %s4, %s446
        $region48: #{tpu_custom_call.1} parent=39 // pred_fallthru
          _
        // Predicated region
        $region49: #{tpu_custom_call.1} parent=39 // pred_check
          %p448 = pneg %p154
        $region50: #{tpu_custom_call.1} parent=39 // pred_check_branch
          %450 = sbr.rel (%p448) target = $region52
        $region51: #{tpu_custom_call.1} parent=39 // pred_region
          %p451 = scmp.lt.s32.totalorder %s35, 2
          %s452 = scalar_select %p451, %s35, 2
          %s453 = smul.addr %s452, 4
          %s454 = smul.addr %s453, 4
          %s455 = scalar_lea.vmem %s5, %s454
        $region52: #{tpu_custom_call.1} parent=39 // pred_fallthru
          _
        // Predicated region
        $region53: #{tpu_custom_call.1} parent=39 // pred_check
          %p456 = pneg %p180
        $region54: #{tpu_custom_call.1} parent=39 // pred_check_branch
          %458 = sbr.rel (%p456) target = $region56
        $region55: #{tpu_custom_call.1} parent=39 // pred_region
          %p459 = scmp.lt.s32.totalorder %s35, 2
          %s460 = scalar_select %p459, %s35, 2
          %s461 = smul.addr %s460, 2
          %s462 = smul.addr %s461, 4
          %s463 = scalar_lea.vmem %s6, %s462
        $region56: #{tpu_custom_call.1} parent=39 // pred_fallthru
          _
        // Predicated region
        $region57: #{tpu_custom_call.1} parent=39 // pred_check
          %p464 = pneg %p206
        $region58: #{tpu_custom_call.1} parent=39 // pred_check_branch
          %466 = sbr.rel (%p464) target = $region60
        $region59: #{tpu_custom_call.1} parent=39 // pred_region
          %p467 = scmp.lt.s32.totalorder %s35, 2
          %s468 = scalar_select %p467, %s35, 2
          %s469 = scalar_lea.vmem %s7, %s468
        $region60: #{tpu_custom_call.1} parent=39 // pred_fallthru
          _
        // Predicated region
        $region61: #{tpu_custom_call.1} parent=39 // pred_check
          %p470 = pneg %p232
        $region62: #{tpu_custom_call.1} parent=39 // pred_check_branch
          %472 = sbr.rel (%p470) target = $region64
        $region63: #{tpu_custom_call.1} parent=39 // pred_region
          %p473 = scmp.lt.s32.totalorder %s35, 2
          %s474 = scalar_select %p473, %s35, 2
          %s475 = scalar_lea.vmem %s8, %s474
        $region64: #{tpu_custom_call.1} parent=39 // pred_fallthru
          _
        // Predicated region
        $region65: #{tpu_custom_call.1} parent=39 // pred_check
          %p476 = pneg %p258
        $region66: #{tpu_custom_call.1} parent=39 // pred_check_branch
          %478 = sbr.rel (%p476) target = $region68
        $region67: #{tpu_custom_call.1} parent=39 // pred_region
          %p479 = scmp.lt.s32.totalorder %s35, 2
          %s480 = scalar_select %p479, %s35, 2
          %s481 = scalar_lea.vmem %s9, %s480
        $region68: #{tpu_custom_call.1} parent=39 // pred_fallthru
          _
        // Predicated region
        $region69: #{tpu_custom_call.1} parent=39 // pred_check
          %p482 = pneg %p307
        $region70: #{tpu_custom_call.1} parent=39 // pred_check_branch
          %484 = sbr.rel (%p482) target = $region72
        $region71: #{tpu_custom_call.1} parent=39 // pred_region
          %p485 = scmp.lt.s32.totalorder %s35, 2
          %s486 = scalar_select %p485, %s35, 2
          %p487 = scmp.lt.s32.totalorder %s36, 3
          %s488 = scalar_select %p487, %s36, 3
          %s489 = smul.addr %s488, 28
          %s490 = smul.addr %s486, 112
          %s491 = sadd.s32 %s489, %s490
          %s492 = smul.addr %s491, 8
          %s493 = scalar_lea.vmem %s11, %s492
        $region72: #{tpu_custom_call.1} parent=39 // pred_fallthru
          _
      $region40: #{tpu_custom_call.1} parent=5 // pred_fallthru
        _
      %p494 = scmp.le.s32.totalorder 1, %s28
      %p495 = scmp.lt.s32.totalorder %s28, 13
      %p496 = pnand %p494, %p495
      %p497 = pneg %p496
      // Predicated region
      $region73: #{tpu_custom_call.1} parent=5 // pred_check
        _
      $region74: #{tpu_custom_call.1} parent=5 // pred_check_branch
        %499 = sbr.rel (%p496) target = $region76
      $region75: #{tpu_custom_call.1} parent=5 // pred_region
        %s500 = ssub.s32 %s28, 1
        %p501 = pneg %p61
        %p502 = pneg %p58
        %p503 = pneg %p82
        %p504 = pneg %p79
        %p505 = scmp.lt.s32.totalorder %s37, 2
        %s506 = scalar_select %p505, %s37, 2
        %s507 = smul.addr %s506, 4
        %s508 = scalar_lea.vmem %s3, %s507
        %p509 = pneg %p108
        %p510 = pneg %p105
        %p511 = scmp.lt.s32.totalorder %s37, 2
        %s512 = scalar_select %p511, %s37, 2
        %s513 = smul.addr %s512, 4
        %s514 = scalar_lea.vmem %s4, %s513
        %p515 = pneg %p134
        %p516 = pneg %p131
        %p517 = scmp.lt.s32.totalorder %s37, 2
        %s518 = scalar_select %p517, %s37, 2
        %s519 = smul.addr %s518, 4
        %s520 = smul.addr %s519, 4
        %s521 = scalar_lea.vmem %s5, %s520
        %p522 = pneg %p160
        %p523 = pneg %p157
        %p524 = scmp.lt.s32.totalorder %s37, 2
        %s525 = scalar_select %p524, %s37, 2
        %s526 = smul.addr %s525, 2
        %s527 = smul.addr %s526, 4
        %s528 = scalar_lea.vmem %s6, %s527
        %p529 = pneg %p186
        %p530 = pneg %p183
        %p531 = scmp.lt.s32.totalorder %s37, 2
        %s532 = scalar_select %p531, %s37, 2
        %s533 = scalar_lea.vmem %s7, %s532
        %p534 = pneg %p212
        %p535 = pneg %p209
        %p536 = scmp.lt.s32.totalorder %s37, 2
        %s537 = scalar_select %p536, %s37, 2
        %s538 = scalar_lea.vmem %s8, %s537
        %p539 = pneg %p238
        %p540 = pneg %p235
        %p541 = scmp.lt.s32.totalorder %s37, 2
        %s542 = scalar_select %p541, %s37, 2
        %s543 = scalar_lea.vmem %s9, %s542
        %p544 = pneg %p264
        %p545 = pneg %p261
        %p546 = pneg %p285
        %p547 = pneg %p282
        %p548 = scmp.lt.s32.totalorder %s37, 2
        %s549 = scalar_select %p548, %s37, 2
        %p550 = scmp.lt.s32.totalorder %s38, 3
        %s551 = scalar_select %p550, %s38, 3
        %s552 = smul.addr %s551, 28
        %s553 = smul.addr %s549, 112
        %s554 = sadd.s32 %s552, %s553
        %s555 = smul.addr %s554, 8
        %s556 = scalar_lea.vmem %s11, %s555
        %p557 = pneg %p313
        %p558 = pneg %p310
        %p559 = pneg %p334
        %p560 = pneg %p331
        %p561 = pneg %p355
        %p562 = pneg %p352
        %p563 = pneg %p376
        %p564 = pneg %p373
        %p565 = pneg %p397
        %p566 = pneg %p394
        %p567 = scmp.lt.s32.totalorder %s37, 2
        %s568 = scalar_select %p567, %s37, 2
        %s569 = smul.addr %s568, 4
        %s570 = scalar_lea.vmem %s3, %s569
        %p571 = scmp.lt.s32.totalorder %s37, 2
        %s572 = scalar_select %p571, %s37, 2
        %s573 = smul.addr %s572, 4
        %s574 = scalar_lea.vmem %s4, %s573
        %p575 = scmp.lt.s32.totalorder %s37, 2
        %s576 = scalar_select %p575, %s37, 2
        %s577 = smul.addr %s576, 4
        %s578 = smul.addr %s577, 4
        %s579 = scalar_lea.vmem %s5, %s578
        %p580 = scmp.lt.s32.totalorder %s37, 2
        %s581 = scalar_select %p580, %s37, 2
        %s582 = smul.addr %s581, 2
        %s583 = smul.addr %s582, 4
        %s584 = scalar_lea.vmem %s6, %s583
        %p585 = scmp.lt.s32.totalorder %s37, 2
        %s586 = scalar_select %p585, %s37, 2
        %s587 = scalar_lea.vmem %s7, %s586
        %p588 = scmp.lt.s32.totalorder %s37, 2
        %s589 = scalar_select %p588, %s37, 2
        %s590 = scalar_lea.vmem %s8, %s589
        %p591 = scmp.lt.s32.totalorder %s37, 2
        %s592 = scalar_select %p591, %s37, 2
        %s593 = scalar_lea.vmem %s9, %s592
        %p594 = scmp.lt.s32.totalorder %s37, 2
        %s595 = scalar_select %p594, %s37, 2
        %p596 = scmp.lt.s32.totalorder %s38, 3
        %s597 = scalar_select %p596, %s38, 3
        %s598 = smul.addr %s597, 28
        %s599 = smul.addr %s595, 112
        %s600 = sadd.s32 %s598, %s599
        %s601 = smul.addr %s600, 8
        %s602 = scalar_lea.vmem %s11, %s601
        %p604 = scmp.eq.s32.totalorder %s37, 0
        %p605 = scmp.eq.s32.totalorder %s38, 0
        %p606 = pnand %p604, %p605
        %p607 = pneg %p606
        // Predicated region
        $region77: #{tpu_custom_call.1} parent=75 // pred_check
          _
        $region78: #{tpu_custom_call.1} parent=75 // pred_check_branch
          %609 = sbr.rel (%p606) target = $region80
        $region79: #{tpu_custom_call.1} parent=75 // pred_region
          %v610 = vld [vmem:[%s12] sm:$0x7f]
          %v611 = vlaneseq
          %vm612 = vcmp.ge.s32.totalorder %v611, 0
          %vm613 = vcmp.lt.s32.totalorder %v611, 832
          %vm614 = vmand %vm612, %vm613
          %615 = vst.msk [vmem:[#allocation3] sm:$0x7f] %vm614, %v610
        $region80: #{tpu_custom_call.1} parent=75 // pred_fallthru
          _
        // Predicated region
        $region81: #{tpu_custom_call.1} parent=75 // pred_check
          %p616 = pneg %p605
        $region82: #{tpu_custom_call.1} parent=75 // pred_check_branch
          %618 = sbr.rel (%p616) target = $region84
        $region83: #{tpu_custom_call.1} parent=75 // pred_region
          %v619 = vld [vmem:[%s2] sm:$0xff]
          %v620 = vld [vmem:[%s2 + $0x8] sm:$0xff]
          %v621 = vpack.c.bf16 %v620, %v619
          %v622 = vld [vmem:[%s579] sm:$0xf]
          %v623 = vld [vmem:[%s579 + $0x4] sm:$0xf]
          %v624 = vld [vmem:[%s579 + $0x8] sm:$0xf]
          %v625 = vld [vmem:[%s579 + $0xc] sm:$0xf]
          %v630 = vunpack.c.l.b16 %v622
          %v631 = vunpack.c.l.b16 %v623
          %v632 = vunpack.c.l.b16 %v624
          %v633 = vunpack.c.l.b16 %v625
          %v634 = vpack.c.b16 %v631, %v630
          %v635 = vpack.c.b16 %v633, %v632
          %vm638 = vcmask 261120
          %v640 = vsel %vm638, %v621, 0
          %642 = vmatprep.subr.bf16.mxu0 0
          %643 = vmatpush1.bf16.msra.mxu0 %v634
          %644 = vmatprep.subr.bf16.mxu0 0
          %645 = vmatpush1.bf16.msra.mxu0 %v635
          %646 = vmatprep.subr.bf16.mxu0 0
          %647 = vmatpush1.bf16.msra.mxu0 0
          %648 = vmatprep.subr.bf16.mxu0 0
          %649 = vmatpush1.bf16.msra.mxu0 0
          %650 = vmatprep.subr.bf16.mxu0 0
          %651 = vmatpush1.bf16.msra.mxu0 0
          %652 = vmatprep.subr.bf16.mxu0 0
          %653 = vmatpush1.bf16.msra.mxu0 0
          %654 = vmatprep.subr.bf16.mxu0 0
          %655 = vmatpush1.bf16.msra.mxu0 0
          %656 = vmatprep.subr.bf16.mxu0 0
          %657 = vmatpush1.bf16.msra.mxu0 0
          %658 = vmatprep.subr.bf16.mxu0 0
          %659 = vmatpush1.bf16.msra.mxu0 0
          %660 = vmatprep.subr.bf16.mxu0 0
          %661 = vmatpush1.bf16.msra.mxu0 0
          %662 = vmatprep.subr.bf16.mxu0 0
          %663 = vmatpush1.bf16.msra.mxu0 0
          %664 = vmatprep.subr.bf16.mxu0 0
          %665 = vmatpush1.bf16.msra.mxu0 0
          %666 = vmatprep.subr.bf16.mxu0 0
          %667 = vmatpush1.bf16.msra.mxu0 0
          %668 = vmatprep.subr.bf16.mxu0 0
          %669 = vmatpush1.bf16.msra.mxu0 0
          %670 = vmatprep.subr.bf16.mxu0 0
          %671 = vmatpush1.bf16.msra.mxu0 0
          %672 = vmatprep.subr.bf16.mxu0 0
          %673 = vmatpush1.bf16.msra.mxu0 0
          %674 = vmatprep.mubr.bf16.mxu0 0
          %675 = vmatmul.mubr.bf16.gmra.mrb[0].mxu0 %v640
          %v676 = vpop.f32.mrb[0].mxu0
          %v677 = vadd.f32 0.0, %v676
          %v678 = vpop.f32.mrb[0].mxu0
          %v679 = vpop.f32.mrb[0].mxu0
          %v680 = vadd.f32 0.0, %v679
          %v681 = vpop.f32.mrb[0].mxu0
          %682 = vdwg.mxu0
          %v683 = vld [vmem:[%s570] sm:$0xf]
          %v684 = vpack.c.bf16 %v683, %v683
          %v685 = vld [vmem:[%s584] sm:$0xf]
          %v686 = vld [vmem:[%s584 + $0x4] sm:$0xf]
          %v689 = vunpack.c.l.b16 %v685
          %v690 = vunpack.c.l.b16 %v686
          %v691 = vpack.c.b16 %v690, %v689
          %vm693 = vcmask 130048
          %v695 = vsel %vm693, %v684, 0
          %697 = vmatprep.subr.bf16.mxu0 0
          %698 = vmatpush1.bf16.msra.mxu0 %v691
          %699 = vmatprep.subr.bf16.mxu0 0
          %700 = vmatpush1.bf16.msra.mxu0 0
          %701 = vmatprep.subr.bf16.mxu0 0
          %702 = vmatpush1.bf16.msra.mxu0 0
          %703 = vmatprep.subr.bf16.mxu0 0
          %704 = vmatpush1.bf16.msra.mxu0 0
          %705 = vmatprep.subr.bf16.mxu0 0
          %706 = vmatpush1.bf16.msra.mxu0 0
          %707 = vmatprep.subr.bf16.mxu0 0
          %708 = vmatpush1.bf16.msra.mxu0 0
          %709 = vmatprep.subr.bf16.mxu0 0
          %710 = vmatpush1.bf16.msra.mxu0 0
          %711 = vmatprep.subr.bf16.mxu0 0
          %712 = vmatpush1.bf16.msra.mxu0 0
          %713 = vmatprep.subr.bf16.mxu0 0
          %714 = vmatpush1.bf16.msra.mxu0 0
          %715 = vmatprep.subr.bf16.mxu0 0
          %716 = vmatpush1.bf16.msra.mxu0 0
          %717 = vmatprep.subr.bf16.mxu0 0
          %718 = vmatpush1.bf16.msra.mxu0 0
          %719 = vmatprep.subr.bf16.mxu0 0
          %720 = vmatpush1.bf16.msra.mxu0 0
          %721 = vmatprep.subr.bf16.mxu0 0
          %722 = vmatpush1.bf16.msra.mxu0 0
          %723 = vmatprep.subr.bf16.mxu0 0
          %724 = vmatpush1.bf16.msra.mxu0 0
          %725 = vmatprep.subr.bf16.mxu0 0
          %726 = vmatpush1.bf16.msra.mxu0 0
          %727 = vmatprep.subr.bf16.mxu0 0
          %728 = vmatpush1.bf16.msra.mxu0 0
          %729 = vmatprep.mubr.bf16.mxu0 0
          %730 = vmatmul.mubr.bf16.gmra.mrb[0].mxu0 %v695
          %v731 = vpop.f32.mrb[0].mxu0
          %v732 = vadd.f32 0.0, %v731
          %v733 = vpop.f32.mrb[0].mxu0
          %v734 = vpop.f32.mrb[0].mxu0
          %v735 = vpop.f32.mrb[0].mxu0
          %736 = vdwg.mxu0
          %v737 = vld [vmem:[%s590] sm:$0x1]
          %v739 = vlaneseq
          %v740 = vshrl.u32 %v739, 7
          %v741 = vsub.s32 0, %v740
          %v742 = vrot.slane %v737, %v741
          %v744 = vmul.f32 %v732, %v742
          %vm745 = vcmask 1043456
          %v746 = vsel %vm745, %v744, 0.0
          %747 = vadd.xlane.f32.xlu0 %v746
          %v748 = vpop.xlane.xlu0 %747
          %v749 = vld [vmem:[%s587] sm:$0x1]
          %750 = vmatprep.subr.mxu0 0.0
          %751 = vmatpush1.xpose.msra.mxu0 %v677
          %752 = vmatprep.subr.mxu0 0.0
          %753 = vmatpush1.xpose.msra.mxu0 %v680
          %754 = vmatprep.subr.mxu0 0.0
          %755 = vmatpush1.xpose.msra.mxu0 0.0
          %756 = vmatprep.subr.mxu0 0.0
          %757 = vmatpush1.xpose.msra.mxu0 0.0
          %758 = vmatprep.subr.mxu0 0.0
          %759 = vmatpush1.xpose.msra.mxu0 0.0
          %760 = vmatprep.subr.mxu0 0.0
          %761 = vmatpush1.xpose.msra.mxu0 0.0
          %762 = vmatprep.subr.mxu0 0.0
          %763 = vmatpush1.xpose.msra.mxu0 0.0
          %764 = vmatprep.subr.mxu0 0.0
          %765 = vmatpush1.xpose.msra.mxu0 0.0
          %766 = vmatprep.subr.mxu0 0.0
          %767 = vmatpush1.xpose.msra.mxu0 0.0
          %768 = vmatprep.subr.mxu0 0.0
          %769 = vmatpush1.xpose.msra.mxu0 0.0
          %770 = vmatprep.subr.mxu0 0.0
          %771 = vmatpush1.xpose.msra.mxu0 0.0
          %772 = vmatprep.subr.mxu0 0.0
          %773 = vmatpush1.xpose.msra.mxu0 0.0
          %774 = vmatprep.subr.mxu0 0.0
          %775 = vmatpush1.xpose.msra.mxu0 0.0
          %776 = vmatprep.subr.mxu0 0.0
          %777 = vmatpush1.xpose.msra.mxu0 0.0
          %778 = vmatprep.subr.mxu0 0.0
          %779 = vmatpush1.xpose.msra.mxu0 0.0
          %780 = vmatprep.subr.mxu0 0.0
          %781 = vmatpush1.xpose.msra.mxu0 0.0
          %782 = vmatprep.subr.mxu0 0.0
          %783 = vmatpush1.xpose.msra.mxu0 0.0
          %784 = vmatprep.subr.mxu0 0.0
          %785 = vmatpush1.xpose.msra.mxu0 0.0
          %786 = vmatprep.subr.mxu0 0.0
          %787 = vmatpush1.xpose.msra.mxu0 0.0
          %788 = vmatprep.subr.mxu0 0.0
          %789 = vmatpush1.xpose.msra.mxu0 0.0
          %790 = vmatprep.subr.mxu0 0.0
          %791 = vmatpush1.xpose.msra.mxu0 0.0
          %792 = vmatprep.subr.mxu0 0.0
          %793 = vmatpush1.xpose.msra.mxu0 0.0
          %794 = vmatprep.subr.mxu0 0.0
          %795 = vmatpush1.xpose.msra.mxu0 0.0
          %796 = vmatprep.subr.mxu0 0.0
          %797 = vmatpush1.xpose.msra.mxu0 0.0
          %798 = vmatprep.subr.mxu0 0.0
          %799 = vmatpush1.xpose.msra.mxu0 0.0
          %800 = vmatprep.subr.mxu0 0.0
          %801 = vmatpush1.xpose.msra.mxu0 0.0
          %802 = vmatprep.subr.mxu0 0.0
          %803 = vmatpush1.xpose.msra.mxu0 0.0
          %804 = vmatprep.subr.mxu0 0.0
          %805 = vmatpush1.xpose.msra.mxu0 0.0
          %806 = vmatprep.subr.mxu0 0.0
          %807 = vmatpush1.xpose.msra.mxu0 0.0
          %808 = vmatprep.subr.mxu0 0.0
          %809 = vmatpush1.xpose.msra.mxu0 0.0
          %810 = vmatprep.subr.mxu0 0.0
          %811 = vmatpush1.xpose.msra.mxu0 0.0
          %812 = vmatprep.subr.mxu0 0.0
          %813 = vmatpush1.xpose.msra.mxu0 0.0
          %814 = vmatprep.mubr.f32.mxu0 0.0
          %815 = vmatmul.mubr.f32.gmra.mrb[0].mxu0 %v749
          %v816 = vpop.f32.mrb[0].mxu0
          %v817 = vadd.f32 0.0, %v816
          %v818 = vpop.f32.mrb[0].mxu0
          %819 = vdwg.mxu0
          %v820 = vlaneseq
          %v821 = vshrl.u32 %v820, 7
          %v822 = vsub.s32 0, %v821
          %v823 = vrot.slane %v817, %v822
          %v824 = vadd.f32 %v748, %v823
          %vm825 = vcmp.gt.f32.partialorder %v824, 0.0
          %v826 = vmul.f32 %v824, 0.2
          %v827 = vsel %vm825, %v824, %v826
          %v828 = vld [vmem:[%s574] sm:$0xf]
          %vm829 = vcmp.gt.f32.partialorder %v828, 0.0
          %v830 = vsel %vm829, %v827, -1e+30
          %vm831 = vcmask 125952
          %v832 = vsel %vm831, %v830, -inf
          %833 = vmax.xlane.f32.xlu0 %v832
          %v834 = vpop.xlane.xlu0 %833
          %v835 = vsub.f32 %v830, %v834
          %v836 = vmul.f32 %v835, 1.442695
          %v837 = vpow.pop %v836
          %v838 = vsel %vm829, %v837, 0.0
          %v839 = vsel %vm831, %v838, 0.0
          %840 = vadd.xlane.f32.xlu0 %v839
          %v841 = vpop.xlane.xlu0 %840
          %v842 = vmax.f32 %v841, 1e-16
          %v843 = vrcp.pop %v842
          %v844 = vmul.f32 %v838, %v843
          %v845 = vld [vmem:[%s593] sm:$0x1]
          %v847 = vlaneseq
          %v848 = vshrl.u32 %v847, 7
          %v849 = vsub.s32 0, %v848
          %v850 = vrot.slane %v845, %v849
          %v853 = vsel %vm693, %v844, 0
          %855 = vmatprep.subr.mxu0 0.0
          %856 = vmatpush1.msra.mxu0 %v677
          %857 = vmatprep.subr.mxu0 0.0
          %858 = vmatpush1.msra.mxu0 %v680
          %859 = vmatprep.subr.mxu0 0.0
          %860 = vmatpush1.msra.mxu0 0.0
          %861 = vmatprep.subr.mxu0 0.0
          %862 = vmatpush1.msra.mxu0 0.0
          %863 = vmatprep.subr.mxu0 0.0
          %864 = vmatpush1.msra.mxu0 0.0
          %865 = vmatprep.subr.mxu0 0.0
          %866 = vmatpush1.msra.mxu0 0.0
          %867 = vmatprep.subr.mxu0 0.0
          %868 = vmatpush1.msra.mxu0 0.0
          %869 = vmatprep.subr.mxu0 0.0
          %870 = vmatpush1.msra.mxu0 0.0
          %871 = vmatprep.subr.mxu0 0.0
          %872 = vmatpush1.msra.mxu0 0.0
          %873 = vmatprep.subr.mxu0 0.0
          %874 = vmatpush1.msra.mxu0 0.0
          %875 = vmatprep.subr.mxu0 0.0
          %876 = vmatpush1.msra.mxu0 0.0
          %877 = vmatprep.subr.mxu0 0.0
          %878 = vmatpush1.msra.mxu0 0.0
          %879 = vmatprep.subr.mxu0 0.0
          %880 = vmatpush1.msra.mxu0 0.0
          %881 = vmatprep.subr.mxu0 0.0
          %882 = vmatpush1.msra.mxu0 0.0
          %883 = vmatprep.subr.mxu0 0.0
          %884 = vmatpush1.msra.mxu0 0.0
          %885 = vmatprep.subr.mxu0 0.0
          %886 = vmatpush1.msra.mxu0 0.0
          %887 = vmatprep.subr.mxu0 0.0
          %888 = vmatpush1.msra.mxu0 0.0
          %889 = vmatprep.subr.mxu0 0.0
          %890 = vmatpush1.msra.mxu0 0.0
          %891 = vmatprep.subr.mxu0 0.0
          %892 = vmatpush1.msra.mxu0 0.0
          %893 = vmatprep.subr.mxu0 0.0
          %894 = vmatpush1.msra.mxu0 0.0
          %895 = vmatprep.subr.mxu0 0.0
          %896 = vmatpush1.msra.mxu0 0.0
          %897 = vmatprep.subr.mxu0 0.0
          %898 = vmatpush1.msra.mxu0 0.0
          %899 = vmatprep.subr.mxu0 0.0
          %900 = vmatpush1.msra.mxu0 0.0
          %901 = vmatprep.subr.mxu0 0.0
          %902 = vmatpush1.msra.mxu0 0.0
          %903 = vmatprep.subr.mxu0 0.0
          %904 = vmatpush1.msra.mxu0 0.0
          %905 = vmatprep.subr.mxu0 0.0
          %906 = vmatpush1.msra.mxu0 0.0
          %907 = vmatprep.subr.mxu0 0.0
          %908 = vmatpush1.msra.mxu0 0.0
          %909 = vmatprep.subr.mxu0 0.0
          %910 = vmatpush1.msra.mxu0 0.0
          %911 = vmatprep.subr.mxu0 0.0
          %912 = vmatpush1.msra.mxu0 0.0
          %913 = vmatprep.subr.mxu0 0.0
          %914 = vmatpush1.msra.mxu0 0.0
          %915 = vmatprep.subr.mxu0 0.0
          %916 = vmatpush1.msra.mxu0 0.0
          %917 = vmatprep.subr.mxu0 0.0
          %918 = vmatpush1.msra.mxu0 0.0
          %919 = vmatprep.mubr.f32.mxu0 0.0
          %920 = vmatmul.mubr.f32.gmra.mrb[0].mxu0 %v853
          %v921 = vpop.f32.mrb[0].mxu0
          %v922 = vadd.f32 %v850, %v921
          %v923 = vpop.f32.mrb[0].mxu0
          %924 = vdwg.mxu0
          %v925 = vtanh.pop %v922
          %926 = vst [vmem:[#allocation2] sm:$0xf] %v925
        $region84: #{tpu_custom_call.1} parent=75 // pred_fallthru
          _
        %s927 = scalar_lea.vmem [#allocation2], %s38
        %v928 = vld [vmem:[%s927] sm:$0x1]
        %v929 = vld [vmem:[%s602] sm:$0xff]
        %v930 = vld [vmem:[%s602 + $0x8] sm:$0xff]
        %v931 = vld [vmem:[%s602 + $0x10] sm:$0xff]
        %v932 = vld [vmem:[%s602 + $0x18] sm:$0xff]
        %v933 = vld [vmem:[%s602 + $0x20] sm:$0xff]
        %v934 = vld [vmem:[%s602 + $0x28] sm:$0xff]
        %v935 = vld [vmem:[%s602 + $0x30] sm:$0xff]
        %v936 = vld [vmem:[%s602 + $0x38] sm:$0xff]
        %v937 = vld [vmem:[%s602 + $0x40] sm:$0xff]
        %v938 = vld [vmem:[%s602 + $0x48] sm:$0xff]
        %v939 = vld [vmem:[%s602 + $0x50] sm:$0xff]
        %v940 = vld [vmem:[%s602 + $0x58] sm:$0xff]
        %v941 = vld [vmem:[%s602 + $0x60] sm:$0xff]
        %v942 = vld [vmem:[%s602 + $0x68] sm:$0xff]
        %v943 = vld [vmem:[%s602 + $0x70] sm:$0xff]
        %v944 = vld [vmem:[%s602 + $0x78] sm:$0xff]
        %v945 = vld [vmem:[%s602 + $0x80] sm:$0xff]
        %v946 = vld [vmem:[%s602 + $0x88] sm:$0xff]
        %v947 = vld [vmem:[%s602 + $0x90] sm:$0xff]
        %v948 = vld [vmem:[%s602 + $0x98] sm:$0xff]
        %v949 = vld [vmem:[%s602 + $0xa0] sm:$0xff]
        %v950 = vld [vmem:[%s602 + $0xa8] sm:$0xff]
        %v951 = vld [vmem:[%s602 + $0xb0] sm:$0xff]
        %v952 = vld [vmem:[%s602 + $0xb8] sm:$0xff]
        %v953 = vld [vmem:[%s602 + $0xc0] sm:$0xff]
        %v954 = vld [vmem:[%s602 + $0xc8] sm:$0xff]
        %v955 = vld [vmem:[%s602 + $0xd0] sm:$0xff]
        %v956 = vld [vmem:[%s602 + $0xd8] sm:$0xff]
        %v957 = vunpack.c.0.s8 %v929
        %v958 = vunpack.c.0.s8 %v930
        %v959 = vunpack.c.0.s8 %v931
        %v960 = vunpack.c.0.s8 %v932
        %v961 = vunpack.c.0.s8 %v933
        %v962 = vunpack.c.0.s8 %v934
        %v963 = vunpack.c.0.s8 %v935
        %v964 = vunpack.c.1.s8 %v929
        %v965 = vunpack.c.1.s8 %v930
        %v966 = vunpack.c.1.s8 %v931
        %v967 = vunpack.c.1.s8 %v932
        %v968 = vunpack.c.1.s8 %v933
        %v969 = vunpack.c.1.s8 %v934
        %v970 = vunpack.c.1.s8 %v935
        %v971 = vunpack.c.2.s8 %v929
        %v972 = vunpack.c.2.s8 %v930
        %v973 = vunpack.c.2.s8 %v931
        %v974 = vunpack.c.2.s8 %v932
        %v975 = vunpack.c.2.s8 %v933
        %v976 = vunpack.c.2.s8 %v934
        %v977 = vunpack.c.2.s8 %v935
        %v978 = vunpack.c.3.s8 %v929
        %v979 = vunpack.c.3.s8 %v930
        %v980 = vunpack.c.3.s8 %v931
        %v981 = vunpack.c.3.s8 %v932
        %v982 = vunpack.c.3.s8 %v933
        %v983 = vunpack.c.3.s8 %v934
        %v984 = vunpack.c.3.s8 %v935
        %v985 = vunpack.c.0.s8 %v936
        %v986 = vunpack.c.0.s8 %v937
        %v987 = vunpack.c.0.s8 %v938
        %v988 = vunpack.c.0.s8 %v939
        %v989 = vunpack.c.0.s8 %v940
        %v990 = vunpack.c.0.s8 %v941
        %v991 = vunpack.c.0.s8 %v942
        %v992 = vunpack.c.1.s8 %v936
        %v993 = vunpack.c.1.s8 %v937
        %v994 = vunpack.c.1.s8 %v938
        %v995 = vunpack.c.1.s8 %v939
        %v996 = vunpack.c.1.s8 %v940
        %v997 = vunpack.c.1.s8 %v941
        %v998 = vunpack.c.1.s8 %v942
        %v999 = vunpack.c.2.s8 %v936
        %v1000 = vunpack.c.2.s8 %v937
        %v1001 = vunpack.c.2.s8 %v938
        %v1002 = vunpack.c.2.s8 %v939
        %v1003 = vunpack.c.2.s8 %v940
        %v1004 = vunpack.c.2.s8 %v941
        %v1005 = vunpack.c.2.s8 %v942
        %v1006 = vunpack.c.3.s8 %v936
        %v1007 = vunpack.c.3.s8 %v937
        %v1008 = vunpack.c.3.s8 %v938
        %v1009 = vunpack.c.3.s8 %v939
        %v1010 = vunpack.c.3.s8 %v940
        %v1011 = vunpack.c.3.s8 %v941
        %v1012 = vunpack.c.3.s8 %v942
        %v1013 = vunpack.c.0.s8 %v943
        %v1014 = vunpack.c.0.s8 %v944
        %v1015 = vunpack.c.0.s8 %v945
        %v1016 = vunpack.c.0.s8 %v946
        %v1017 = vunpack.c.0.s8 %v947
        %v1018 = vunpack.c.0.s8 %v948
        %v1019 = vunpack.c.0.s8 %v949
        %v1020 = vunpack.c.1.s8 %v943
        %v1021 = vunpack.c.1.s8 %v944
        %v1022 = vunpack.c.1.s8 %v945
        %v1023 = vunpack.c.1.s8 %v946
        %v1024 = vunpack.c.1.s8 %v947
        %v1025 = vunpack.c.1.s8 %v948
        %v1026 = vunpack.c.1.s8 %v949
        %v1027 = vunpack.c.2.s8 %v943
        %v1028 = vunpack.c.2.s8 %v944
        %v1029 = vunpack.c.2.s8 %v945
        %v1030 = vunpack.c.2.s8 %v946
        %v1031 = vunpack.c.2.s8 %v947
        %v1032 = vunpack.c.2.s8 %v948
        %v1033 = vunpack.c.2.s8 %v949
        %v1034 = vunpack.c.3.s8 %v943
        %v1035 = vunpack.c.3.s8 %v944
        %v1036 = vunpack.c.3.s8 %v945
        %v1037 = vunpack.c.3.s8 %v946
        %v1038 = vunpack.c.3.s8 %v947
        %v1039 = vunpack.c.3.s8 %v948
        %v1040 = vunpack.c.3.s8 %v949
        %v1041 = vunpack.c.0.s8 %v950
        %v1042 = vunpack.c.0.s8 %v951
        %v1043 = vunpack.c.0.s8 %v952
        %v1044 = vunpack.c.0.s8 %v953
        %v1045 = vunpack.c.0.s8 %v954
        %v1046 = vunpack.c.0.s8 %v955
        %v1047 = vunpack.c.0.s8 %v956
        %v1048 = vunpack.c.1.s8 %v950
        %v1049 = vunpack.c.1.s8 %v951
        %v1050 = vunpack.c.1.s8 %v952
        %v1051 = vunpack.c.1.s8 %v953
        %v1052 = vunpack.c.1.s8 %v954
        %v1053 = vunpack.c.1.s8 %v955
        %v1054 = vunpack.c.1.s8 %v956
        %v1055 = vunpack.c.2.s8 %v950
        %v1056 = vunpack.c.2.s8 %v951
        %v1057 = vunpack.c.2.s8 %v952
        %v1058 = vunpack.c.2.s8 %v953
        %v1059 = vunpack.c.2.s8 %v954
        %v1060 = vunpack.c.2.s8 %v955
        %v1061 = vunpack.c.2.s8 %v956
        %v1062 = vunpack.c.3.s8 %v950
        %v1063 = vunpack.c.3.s8 %v951
        %v1064 = vunpack.c.3.s8 %v952
        %v1065 = vunpack.c.3.s8 %v953
        %v1066 = vunpack.c.3.s8 %v954
        %v1067 = vunpack.c.3.s8 %v955
        %v1068 = vunpack.c.3.s8 %v956
        %v1069 = vcvt.s32.f32 %v957
        %v1070 = vcvt.s32.f32 %v958
        %v1071 = vcvt.s32.f32 %v959
        %v1072 = vcvt.s32.f32 %v960
        %v1073 = vcvt.s32.f32 %v961
        %v1074 = vcvt.s32.f32 %v962
        %v1075 = vcvt.s32.f32 %v963
        %v1076 = vcvt.s32.f32 %v964
        %v1077 = vcvt.s32.f32 %v965
        %v1078 = vcvt.s32.f32 %v966
        %v1079 = vcvt.s32.f32 %v967
        %v1080 = vcvt.s32.f32 %v968
        %v1081 = vcvt.s32.f32 %v969
        %v1082 = vcvt.s32.f32 %v970
        %v1083 = vcvt.s32.f32 %v971
        %v1084 = vcvt.s32.f32 %v972
        %v1085 = vcvt.s32.f32 %v973
        %v1086 = vcvt.s32.f32 %v974
        %v1087 = vcvt.s32.f32 %v975
        %v1088 = vcvt.s32.f32 %v976
        %v1089 = vcvt.s32.f32 %v977
        %v1090 = vcvt.s32.f32 %v978
        %v1091 = vcvt.s32.f32 %v979
        %v1092 = vcvt.s32.f32 %v980
        %v1093 = vcvt.s32.f32 %v981
        %v1094 = vcvt.s32.f32 %v982
        %v1095 = vcvt.s32.f32 %v983
        %v1096 = vcvt.s32.f32 %v984
        %v1097 = vcvt.s32.f32 %v985
        %v1098 = vcvt.s32.f32 %v986
        %v1099 = vcvt.s32.f32 %v987
        %v1100 = vcvt.s32.f32 %v988
        %v1101 = vcvt.s32.f32 %v989
        %v1102 = vcvt.s32.f32 %v990
        %v1103 = vcvt.s32.f32 %v991
        %v1104 = vcvt.s32.f32 %v992
        %v1105 = vcvt.s32.f32 %v993
        %v1106 = vcvt.s32.f32 %v994
        %v1107 = vcvt.s32.f32 %v995
        %v1108 = vcvt.s32.f32 %v996
        %v1109 = vcvt.s32.f32 %v997
        %v1110 = vcvt.s32.f32 %v998
        %v1111 = vcvt.s32.f32 %v999
        %v1112 = vcvt.s32.f32 %v1000
        %v1113 = vcvt.s32.f32 %v1001
        %v1114 = vcvt.s32.f32 %v1002
        %v1115 = vcvt.s32.f32 %v1003
        %v1116 = vcvt.s32.f32 %v1004
        %v1117 = vcvt.s32.f32 %v1005
        %v1118 = vcvt.s32.f32 %v1006
        %v1119 = vcvt.s32.f32 %v1007
        %v1120 = vcvt.s32.f32 %v1008
        %v1121 = vcvt.s32.f32 %v1009
        %v1122 = vcvt.s32.f32 %v1010
        %v1123 = vcvt.s32.f32 %v1011
        %v1124 = vcvt.s32.f32 %v1012
        %v1125 = vcvt.s32.f32 %v1013
        %v1126 = vcvt.s32.f32 %v1014
        %v1127 = vcvt.s32.f32 %v1015
        %v1128 = vcvt.s32.f32 %v1016
        %v1129 = vcvt.s32.f32 %v1017
        %v1130 = vcvt.s32.f32 %v1018
        %v1131 = vcvt.s32.f32 %v1019
        %v1132 = vcvt.s32.f32 %v1020
        %v1133 = vcvt.s32.f32 %v1021
        %v1134 = vcvt.s32.f32 %v1022
        %v1135 = vcvt.s32.f32 %v1023
        %v1136 = vcvt.s32.f32 %v1024
        %v1137 = vcvt.s32.f32 %v1025
        %v1138 = vcvt.s32.f32 %v1026
        %v1139 = vcvt.s32.f32 %v1027
        %v1140 = vcvt.s32.f32 %v1028
        %v1141 = vcvt.s32.f32 %v1029
        %v1142 = vcvt.s32.f32 %v1030
        %v1143 = vcvt.s32.f32 %v1031
        %v1144 = vcvt.s32.f32 %v1032
        %v1145 = vcvt.s32.f32 %v1033
        %v1146 = vcvt.s32.f32 %v1034
        %v1147 = vcvt.s32.f32 %v1035
        %v1148 = vcvt.s32.f32 %v1036
        %v1149 = vcvt.s32.f32 %v1037
        %v1150 = vcvt.s32.f32 %v1038
        %v1151 = vcvt.s32.f32 %v1039
        %v1152 = vcvt.s32.f32 %v1040
        %v1153 = vcvt.s32.f32 %v1041
        %v1154 = vcvt.s32.f32 %v1042
        %v1155 = vcvt.s32.f32 %v1043
        %v1156 = vcvt.s32.f32 %v1044
        %v1157 = vcvt.s32.f32 %v1045
        %v1158 = vcvt.s32.f32 %v1046
        %v1159 = vcvt.s32.f32 %v1047
        %v1160 = vcvt.s32.f32 %v1048
        %v1161 = vcvt.s32.f32 %v1049
        %v1162 = vcvt.s32.f32 %v1050
        %v1163 = vcvt.s32.f32 %v1051
        %v1164 = vcvt.s32.f32 %v1052
        %v1165 = vcvt.s32.f32 %v1053
        %v1166 = vcvt.s32.f32 %v1054
        %v1167 = vcvt.s32.f32 %v1055
        %v1168 = vcvt.s32.f32 %v1056
        %v1169 = vcvt.s32.f32 %v1057
        %v1170 = vcvt.s32.f32 %v1058
        %v1171 = vcvt.s32.f32 %v1059
        %v1172 = vcvt.s32.f32 %v1060
        %v1173 = vcvt.s32.f32 %v1061
        %v1174 = vcvt.s32.f32 %v1062
        %v1175 = vcvt.s32.f32 %v1063
        %v1176 = vcvt.s32.f32 %v1064
        %v1177 = vcvt.s32.f32 %v1065
        %v1178 = vcvt.s32.f32 %v1066
        %v1179 = vcvt.s32.f32 %v1067
        %v1180 = vcvt.s32.f32 %v1068
        %1181 = vmatprep.subr.mxu0 %v1070
        %1182 = vmatpush1.msra.mxu0 %v1069
        %1183 = vmatprep.subr.mxu0 %v1077
        %1184 = vmatpush1.msra.mxu0 %v1076
        %1185 = vmatprep.subr.mxu0 %v1084
        %1186 = vmatpush1.msra.mxu0 %v1083
        %1187 = vmatprep.subr.mxu0 %v1091
        %1188 = vmatpush1.msra.mxu0 %v1090
        %1189 = vmatprep.subr.mxu0 %v1098
        %1190 = vmatpush1.msra.mxu0 %v1097
        %1191 = vmatprep.subr.mxu0 %v1105
        %1192 = vmatpush1.msra.mxu0 %v1104
        %1193 = vmatprep.subr.mxu0 %v1112
        %1194 = vmatpush1.msra.mxu0 %v1111
        %1195 = vmatprep.subr.mxu0 %v1119
        %1196 = vmatpush1.msra.mxu0 %v1118
        %1197 = vmatprep.subr.mxu0 %v1126
        %1198 = vmatpush1.msra.mxu0 %v1125
        %1199 = vmatprep.subr.mxu0 %v1133
        %1200 = vmatpush1.msra.mxu0 %v1132
        %1201 = vmatprep.subr.mxu0 %v1140
        %1202 = vmatpush1.msra.mxu0 %v1139
        %1203 = vmatprep.subr.mxu0 %v1147
        %1204 = vmatpush1.msra.mxu0 %v1146
        %1205 = vmatprep.subr.mxu0 %v1154
        %1206 = vmatpush1.msra.mxu0 %v1153
        %1207 = vmatprep.subr.mxu0 %v1161
        %1208 = vmatpush1.msra.mxu0 %v1160
        %1209 = vmatprep.subr.mxu0 %v1168
        %1210 = vmatpush1.msra.mxu0 %v1167
        %1211 = vmatprep.subr.mxu0 %v1175
        %1212 = vmatpush1.msra.mxu0 %v1174
        %1213 = vmatprep.subr.mxu0 0.0
        %1214 = vmatpush1.msra.mxu0 0.0
        %1215 = vmatprep.subr.mxu0 0.0
        %1216 = vmatpush1.msra.mxu0 0.0
        %1217 = vmatprep.subr.mxu0 0.0
        %1218 = vmatpush1.msra.mxu0 0.0
        %1219 = vmatprep.subr.mxu0 0.0
        %1220 = vmatpush1.msra.mxu0 0.0
        %1221 = vmatprep.subr.mxu0 0.0
        %1222 = vmatpush1.msra.mxu0 0.0
        %1223 = vmatprep.subr.mxu0 0.0
        %1224 = vmatpush1.msra.mxu0 0.0
        %1225 = vmatprep.subr.mxu0 0.0
        %1226 = vmatpush1.msra.mxu0 0.0
        %1227 = vmatprep.subr.mxu0 0.0
        %1228 = vmatpush1.msra.mxu0 0.0
        %1229 = vmatprep.subr.mxu0 0.0
        %1230 = vmatpush1.msra.mxu0 0.0
        %1231 = vmatprep.subr.mxu0 0.0
        %1232 = vmatpush1.msra.mxu0 0.0
        %1233 = vmatprep.subr.mxu0 0.0
        %1234 = vmatpush1.msra.mxu0 0.0
        %1235 = vmatprep.subr.mxu0 0.0
        %1236 = vmatpush1.msra.mxu0 0.0
        %1237 = vmatprep.subr.mxu0 0.0
        %1238 = vmatpush1.msra.mxu0 0.0
        %1239 = vmatprep.subr.mxu0 0.0
        %1240 = vmatpush1.msra.mxu0 0.0
        %1241 = vmatprep.subr.mxu0 0.0
        %1242 = vmatpush1.msra.mxu0 0.0
        %1243 = vmatprep.subr.mxu0 0.0
        %1244 = vmatpush1.msra.mxu0 0.0
        %1245 = vmatprep.mubr.f32.mxu0 0.0
        %1246 = vmatmul.mubr.f32.gmra.mrb[0].mxu0 %v928
        %v1247 = vpop.f32.mrb[0].mxu0
        %v1248 = vadd.f32 0.0, %v1247
        %v1249 = vpop.f32.mrb[0].mxu0
        %v1250 = vadd.f32 0.0, %v1249
        %1251 = vdwg.mxu0
        %1252 = vmatprep.subr.mxu0 %v1072
        %1253 = vmatpush1.msra.mxu0 %v1071
        %1254 = vmatprep.subr.mxu0 %v1079
        %1255 = vmatpush1.msra.mxu0 %v1078
        %1256 = vmatprep.subr.mxu0 %v1086
        %1257 = vmatpush1.msra.mxu0 %v1085
        %1258 = vmatprep.subr.mxu0 %v1093
        %1259 = vmatpush1.msra.mxu0 %v1092
        %1260 = vmatprep.subr.mxu0 %v1100
        %1261 = vmatpush1.msra.mxu0 %v1099
        %1262 = vmatprep.subr.mxu0 %v1107
        %1263 = vmatpush1.msra.mxu0 %v1106
        %1264 = vmatprep.subr.mxu0 %v1114
        %1265 = vmatpush1.msra.mxu0 %v1113
        %1266 = vmatprep.subr.mxu0 %v1121
        %1267 = vmatpush1.msra.mxu0 %v1120
        %1268 = vmatprep.subr.mxu0 %v1128
        %1269 = vmatpush1.msra.mxu0 %v1127
        %1270 = vmatprep.subr.mxu0 %v1135
        %1271 = vmatpush1.msra.mxu0 %v1134
        %1272 = vmatprep.subr.mxu0 %v1142
        %1273 = vmatpush1.msra.mxu0 %v1141
        %1274 = vmatprep.subr.mxu0 %v1149
        %1275 = vmatpush1.msra.mxu0 %v1148
        %1276 = vmatprep.subr.mxu0 %v1156
        %1277 = vmatpush1.msra.mxu0 %v1155
        %1278 = vmatprep.subr.mxu0 %v1163
        %1279 = vmatpush1.msra.mxu0 %v1162
        %1280 = vmatprep.subr.mxu0 %v1170
        %1281 = vmatpush1.msra.mxu0 %v1169
        %1282 = vmatprep.subr.mxu0 %v1177
        %1283 = vmatpush1.msra.mxu0 %v1176
        %1284 = vmatprep.subr.mxu0 0.0
        %1285 = vmatpush1.msra.mxu0 0.0
        %1286 = vmatprep.subr.mxu0 0.0
        %1287 = vmatpush1.msra.mxu0 0.0
        %1288 = vmatprep.subr.mxu0 0.0
        %1289 = vmatpush1.msra.mxu0 0.0
        %1290 = vmatprep.subr.mxu0 0.0
        %1291 = vmatpush1.msra.mxu0 0.0
        %1292 = vmatprep.subr.mxu0 0.0
        %1293 = vmatpush1.msra.mxu0 0.0
        %1294 = vmatprep.subr.mxu0 0.0
        %1295 = vmatpush1.msra.mxu0 0.0
        %1296 = vmatprep.subr.mxu0 0.0
        %1297 = vmatpush1.msra.mxu0 0.0
        %1298 = vmatprep.subr.mxu0 0.0
        %1299 = vmatpush1.msra.mxu0 0.0
        %1300 = vmatprep.subr.mxu0 0.0
        %1301 = vmatpush1.msra.mxu0 0.0
        %1302 = vmatprep.subr.mxu0 0.0
        %1303 = vmatpush1.msra.mxu0 0.0
        %1304 = vmatprep.subr.mxu0 0.0
        %1305 = vmatpush1.msra.mxu0 0.0
        %1306 = vmatprep.subr.mxu0 0.0
        %1307 = vmatpush1.msra.mxu0 0.0
        %1308 = vmatprep.subr.mxu0 0.0
        %1309 = vmatpush1.msra.mxu0 0.0
        %1310 = vmatprep.subr.mxu0 0.0
        %1311 = vmatpush1.msra.mxu0 0.0
        %1312 = vmatprep.subr.mxu0 0.0
        %1313 = vmatpush1.msra.mxu0 0.0
        %1314 = vmatprep.subr.mxu0 0.0
        %1315 = vmatpush1.msra.mxu0 0.0
        %1316 = vmatprep.mubr.f32.mxu0 0.0
        %1317 = vmatmul.mubr.f32.gmra.mrb[0].mxu0 %v928
        %v1318 = vpop.f32.mrb[0].mxu0
        %v1319 = vadd.f32 0.0, %v1318
        %v1320 = vpop.f32.mrb[0].mxu0
        %v1321 = vadd.f32 0.0, %v1320
        %1322 = vdwg.mxu0
        %1323 = vmatprep.subr.mxu0 %v1074
        %1324 = vmatpush1.msra.mxu0 %v1073
        %1325 = vmatprep.subr.mxu0 %v1081
        %1326 = vmatpush1.msra.mxu0 %v1080
        %1327 = vmatprep.subr.mxu0 %v1088
        %1328 = vmatpush1.msra.mxu0 %v1087
        %1329 = vmatprep.subr.mxu0 %v1095
        %1330 = vmatpush1.msra.mxu0 %v1094
        %1331 = vmatprep.subr.mxu0 %v1102
        %1332 = vmatpush1.msra.mxu0 %v1101
        %1333 = vmatprep.subr.mxu0 %v1109
        %1334 = vmatpush1.msra.mxu0 %v1108
        %1335 = vmatprep.subr.mxu0 %v1116
        %1336 = vmatpush1.msra.mxu0 %v1115
        %1337 = vmatprep.subr.mxu0 %v1123
        %1338 = vmatpush1.msra.mxu0 %v1122
        %1339 = vmatprep.subr.mxu0 %v1130
        %1340 = vmatpush1.msra.mxu0 %v1129
        %1341 = vmatprep.subr.mxu0 %v1137
        %1342 = vmatpush1.msra.mxu0 %v1136
        %1343 = vmatprep.subr.mxu0 %v1144
        %1344 = vmatpush1.msra.mxu0 %v1143
        %1345 = vmatprep.subr.mxu0 %v1151
        %1346 = vmatpush1.msra.mxu0 %v1150
        %1347 = vmatprep.subr.mxu0 %v1158
        %1348 = vmatpush1.msra.mxu0 %v1157
        %1349 = vmatprep.subr.mxu0 %v1165
        %1350 = vmatpush1.msra.mxu0 %v1164
        %1351 = vmatprep.subr.mxu0 %v1172
        %1352 = vmatpush1.msra.mxu0 %v1171
        %1353 = vmatprep.subr.mxu0 %v1179
        %1354 = vmatpush1.msra.mxu0 %v1178
        %1355 = vmatprep.subr.mxu0 0.0
        %1356 = vmatpush1.msra.mxu0 0.0
        %1357 = vmatprep.subr.mxu0 0.0
        %1358 = vmatpush1.msra.mxu0 0.0
        %1359 = vmatprep.subr.mxu0 0.0
        %1360 = vmatpush1.msra.mxu0 0.0
        %1361 = vmatprep.subr.mxu0 0.0
        %1362 = vmatpush1.msra.mxu0 0.0
        %1363 = vmatprep.subr.mxu0 0.0
        %1364 = vmatpush1.msra.mxu0 0.0
        %1365 = vmatprep.subr.mxu0 0.0
        %1366 = vmatpush1.msra.mxu0 0.0
        %1367 = vmatprep.subr.mxu0 0.0
        %1368 = vmatpush1.msra.mxu0 0.0
        %1369 = vmatprep.subr.mxu0 0.0
        %1370 = vmatpush1.msra.mxu0 0.0
        %1371 = vmatprep.subr.mxu0 0.0
        %1372 = vmatpush1.msra.mxu0 0.0
        %1373 = vmatprep.subr.mxu0 0.0
        %1374 = vmatpush1.msra.mxu0 0.0
        %1375 = vmatprep.subr.mxu0 0.0
        %1376 = vmatpush1.msra.mxu0 0.0
        %1377 = vmatprep.subr.mxu0 0.0
        %1378 = vmatpush1.msra.mxu0 0.0
        %1379 = vmatprep.subr.mxu0 0.0
        %1380 = vmatpush1.msra.mxu0 0.0
        %1381 = vmatprep.subr.mxu0 0.0
        %1382 = vmatpush1.msra.mxu0 0.0
        %1383 = vmatprep.subr.mxu0 0.0
        %1384 = vmatpush1.msra.mxu0 0.0
        %1385 = vmatprep.subr.mxu0 0.0
        %1386 = vmatpush1.msra.mxu0 0.0
        %1387 = vmatprep.mubr.f32.mxu0 0.0
        %1388 = vmatmul.mubr.f32.gmra.mrb[0].mxu0 %v928
        %v1389 = vpop.f32.mrb[0].mxu0
        %v1390 = vadd.f32 0.0, %v1389
        %v1391 = vpop.f32.mrb[0].mxu0
        %v1392 = vadd.f32 0.0, %v1391
        %1393 = vdwg.mxu0
        %1394 = vmatprep.subr.mxu0 0.0
        %1395 = vmatpush1.msra.mxu0 %v1075
        %1396 = vmatprep.subr.mxu0 0.0
        %1397 = vmatpush1.msra.mxu0 %v1082
        %1398 = vmatprep.subr.mxu0 0.0
        %1399 = vmatpush1.msra.mxu0 %v1089
        %1400 = vmatprep.subr.mxu0 0.0
        %1401 = vmatpush1.msra.mxu0 %v1096
        %1402 = vmatprep.subr.mxu0 0.0
        %1403 = vmatpush1.msra.mxu0 %v1103
        %1404 = vmatprep.subr.mxu0 0.0
        %1405 = vmatpush1.msra.mxu0 %v1110
        %1406 = vmatprep.subr.mxu0 0.0
        %1407 = vmatpush1.msra.mxu0 %v1117
        %1408 = vmatprep.subr.mxu0 0.0
        %1409 = vmatpush1.msra.mxu0 %v1124
        %1410 = vmatprep.subr.mxu0 0.0
        %1411 = vmatpush1.msra.mxu0 %v1131
        %1412 = vmatprep.subr.mxu0 0.0
        %1413 = vmatpush1.msra.mxu0 %v1138
        %1414 = vmatprep.subr.mxu0 0.0
        %1415 = vmatpush1.msra.mxu0 %v1145
        %1416 = vmatprep.subr.mxu0 0.0
        %1417 = vmatpush1.msra.mxu0 %v1152
        %1418 = vmatprep.subr.mxu0 0.0
        %1419 = vmatpush1.msra.mxu0 %v1159
        %1420 = vmatprep.subr.mxu0 0.0
        %1421 = vmatpush1.msra.mxu0 %v1166
        %1422 = vmatprep.subr.mxu0 0.0
        %1423 = vmatpush1.msra.mxu0 %v1173
        %1424 = vmatprep.subr.mxu0 0.0
        %1425 = vmatpush1.msra.mxu0 %v1180
        %1426 = vmatprep.subr.mxu0 0.0
        %1427 = vmatpush1.msra.mxu0 0.0
        %1428 = vmatprep.subr.mxu0 0.0
        %1429 = vmatpush1.msra.mxu0 0.0
        %1430 = vmatprep.subr.mxu0 0.0
        %1431 = vmatpush1.msra.mxu0 0.0
        %1432 = vmatprep.subr.mxu0 0.0
        %1433 = vmatpush1.msra.mxu0 0.0
        %1434 = vmatprep.subr.mxu0 0.0
        %1435 = vmatpush1.msra.mxu0 0.0
        %1436 = vmatprep.subr.mxu0 0.0
        %1437 = vmatpush1.msra.mxu0 0.0
        %1438 = vmatprep.subr.mxu0 0.0
        %1439 = vmatpush1.msra.mxu0 0.0
        %1440 = vmatprep.subr.mxu0 0.0
        %1441 = vmatpush1.msra.mxu0 0.0
        %1442 = vmatprep.subr.mxu0 0.0
        %1443 = vmatpush1.msra.mxu0 0.0
        %1444 = vmatprep.subr.mxu0 0.0
        %1445 = vmatpush1.msra.mxu0 0.0
        %1446 = vmatprep.subr.mxu0 0.0
        %1447 = vmatpush1.msra.mxu0 0.0
        %1448 = vmatprep.subr.mxu0 0.0
        %1449 = vmatpush1.msra.mxu0 0.0
        %1450 = vmatprep.subr.mxu0 0.0
        %1451 = vmatpush1.msra.mxu0 0.0
        %1452 = vmatprep.subr.mxu0 0.0
        %1453 = vmatpush1.msra.mxu0 0.0
        %1454 = vmatprep.subr.mxu0 0.0
        %1455 = vmatpush1.msra.mxu0 0.0
        %1456 = vmatprep.subr.mxu0 0.0
        %1457 = vmatpush1.msra.mxu0 0.0
        %1458 = vmatprep.mubr.f32.mxu0 0.0
        %1459 = vmatmul.mubr.f32.gmra.mrb[0].mxu0 %v928
        %v1460 = vpop.f32.mrb[0].mxu0
        %v1461 = vadd.f32 0.0, %v1460
        %v1462 = vpop.f32.mrb[0].mxu0
        %1463 = vdwg.mxu0
        %v1464 = vld [vmem:[#allocation3] sm:$0x7f]
        %s1465 = smul.u32 %s37, 4
        %s1466 = sadd.s32 %s1465, %s38
        %s1467 = sld [smem:[#allocation5 + %s1466]]
        %v1468 = vstv %s1467
        %v1469 = vmul.f32 %v1248, %v1468
        %v1470 = vmul.f32 %v1250, %v1468
        %v1471 = vmul.f32 %v1319, %v1468
        %v1472 = vmul.f32 %v1321, %v1468
        %v1473 = vmul.f32 %v1390, %v1468
        %v1474 = vmul.f32 %v1392, %v1468
        %v1475 = vmul.f32 %v1461, %v1468
        %v1483 = vcombine.low %v1469, %v1470
        %v1484 = vcombine.low %v1471, %v1472
        %v1485 = vcombine.low %v1473, %v1474
        %v1487 = vunpack.c.l.s4 1966171168
        %v1488 = vunpack.c.0.s8 %v1487
        %v1489 = vlaneseq
        %v1490 = vshrl.u32 %v1489, 7
        %v1491 = vsub.s32 %v1488, %v1490
        %v1492 = vrot.slane %v1483, %v1491
        %v1494 = vunpack.c.l.s4 1966171168
        %v1495 = vunpack.c.0.s8 %v1494
        %v1496 = vlaneseq
        %v1497 = vshrl.u32 %v1496, 7
        %v1498 = vsub.s32 %v1495, %v1497
        %v1499 = vrot.slane %v1484, %v1498
        %v1501 = vunpack.c.l.s4 1966171168
        %v1502 = vunpack.c.0.s8 %v1501
        %v1503 = vlaneseq
        %v1504 = vshrl.u32 %v1503, 7
        %v1505 = vsub.s32 %v1502, %v1504
        %v1506 = vrot.slane %v1485, %v1505
        %v1508 = vunpack.c.l.s4 1966171168
        %v1509 = vunpack.c.0.s8 %v1508
        %v1510 = vlaneseq
        %v1511 = vshrl.u32 %v1510, 7
        %v1512 = vsub.s32 %v1509, %v1511
        %v1513 = vrot.slane %v1475, %v1512
        %v1514 = vcombine.low %v1492, %v1499
        %v1515 = vcombine.low %v1506, %v1513
        %v1517 = vunpack.c.l.s4 1966171168
        %v1518 = vunpack.c.0.s8 %v1517
        %v1519 = vlaneseq
        %v1520 = vshrl.u32 %v1519, 7
        %v1521 = vsub.s32 %v1518, %v1520
        %v1522 = vrot.slane %v1514, %v1521
        %v1524 = vunpack.c.l.s4 1966171168
        %v1525 = vunpack.c.0.s8 %v1524
        %v1526 = vlaneseq
        %v1527 = vshrl.u32 %v1526, 7
        %v1528 = vsub.s32 %v1525, %v1527
        %v1529 = vrot.slane %v1515, %v1528
        %v1530 = vcombine.low %v1522, %v1529
        %v1532 = vadd.f32 %v1464, %v1530
        %v1533 = vlaneseq
        %vm1534 = vcmp.ge.s32.totalorder %v1533, 0
        %vm1535 = vcmp.lt.s32.totalorder %v1533, 832
        %vm1536 = vmand %vm1534, %vm1535
        %1537 = vst.msk [vmem:[#allocation3] sm:$0x7f] %vm1536, %v1532
        %p1538 = scmp.eq.s32.totalorder %s37, 2
        %p1539 = scmp.eq.s32.totalorder %s38, 3
        %p1540 = pnand %p1538, %p1539
        %p1541 = pneg %p1540
        // Predicated region
        $region85: #{tpu_custom_call.1} parent=75 // pred_check
          _
        $region86: #{tpu_custom_call.1} parent=75 // pred_check_branch
          %1543 = sbr.rel (%p1540) target = $region88
        $region87: #{tpu_custom_call.1} parent=75 // pred_region
          %v1544 = vld [vmem:[%s1] sm:$0xff]
          %v1545 = vpack.c.bf16 %v1544, %v1544
          %v1546 = vld [vmem:[%s10] sm:$0xff]
          %v1547 = vld [vmem:[%s10 + $0x8] sm:$0xff]
          %v1548 = vld [vmem:[%s10 + $0x10] sm:$0xff]
          %v1549 = vld [vmem:[%s10 + $0x18] sm:$0xf]
          %v1550 = vld [vmem:[%s10 + $0x1c] sm:$0xff]
          %v1551 = vld [vmem:[%s10 + $0x24] sm:$0xff]
          %v1552 = vld [vmem:[%s10 + $0x2c] sm:$0xff]
          %v1553 = vld [vmem:[%s10 + $0x34] sm:$0xf]
          %v1554 = vld [vmem:[%s10 + $0x38] sm:$0xff]
          %v1555 = vld [vmem:[%s10 + $0x40] sm:$0xff]
          %v1556 = vld [vmem:[%s10 + $0x48] sm:$0xff]
          %v1557 = vld [vmem:[%s10 + $0x50] sm:$0xf]
          %v1558 = vld [vmem:[%s10 + $0x54] sm:$0xff]
          %v1559 = vld [vmem:[%s10 + $0x5c] sm:$0xff]
          %v1560 = vld [vmem:[%s10 + $0x64] sm:$0xff]
          %v1561 = vld [vmem:[%s10 + $0x6c] sm:$0xf]
          %v1562 = vld [vmem:[%s10 + $0x70] sm:$0xff]
          %v1563 = vld [vmem:[%s10 + $0x78] sm:$0xff]
          %v1564 = vld [vmem:[%s10 + $0x80] sm:$0xff]
          %v1565 = vld [vmem:[%s10 + $0x88] sm:$0xf]
          %v1566 = vld [vmem:[%s10 + $0x8c] sm:$0xff]
          %v1567 = vld [vmem:[%s10 + $0x94] sm:$0xff]
          %v1568 = vld [vmem:[%s10 + $0x9c] sm:$0xff]
          %v1569 = vld [vmem:[%s10 + $0xa4] sm:$0xf]
          %v1570 = vld [vmem:[%s10 + $0xa8] sm:$0xff]
          %v1571 = vld [vmem:[%s10 + $0xb0] sm:$0xff]
          %v1572 = vld [vmem:[%s10 + $0xb8] sm:$0xff]
          %v1573 = vld [vmem:[%s10 + $0xc0] sm:$0xf]
          %v1574 = vld [vmem:[%s10 + $0xc4] sm:$0xff]
          %v1575 = vld [vmem:[%s10 + $0xcc] sm:$0xff]
          %v1576 = vld [vmem:[%s10 + $0xd4] sm:$0xff]
          %v1577 = vld [vmem:[%s10 + $0xdc] sm:$0xf]
          %v1578 = vld [vmem:[%s10 + $0xe0] sm:$0xff]
          %v1579 = vld [vmem:[%s10 + $0xe8] sm:$0xff]
          %v1580 = vld [vmem:[%s10 + $0xf0] sm:$0xff]
          %v1581 = vld [vmem:[%s10 + $0xf8] sm:$0xf]
          %v1582 = vld [vmem:[%s10 + $0xfc] sm:$0xff]
          %v1583 = vld [vmem:[%s10 + $0x104] sm:$0xff]
          %v1584 = vld [vmem:[%s10 + $0x10c] sm:$0xff]
          %v1585 = vld [vmem:[%s10 + $0x114] sm:$0xf]
          %v1586 = vld [vmem:[%s10 + $0x118] sm:$0xff]
          %v1587 = vld [vmem:[%s10 + $0x120] sm:$0xff]
          %v1588 = vld [vmem:[%s10 + $0x128] sm:$0xff]
          %v1589 = vld [vmem:[%s10 + $0x130] sm:$0xf]
          %v1590 = vld [vmem:[%s10 + $0x134] sm:$0xff]
          %v1591 = vld [vmem:[%s10 + $0x13c] sm:$0xff]
          %v1592 = vld [vmem:[%s10 + $0x144] sm:$0xff]
          %v1593 = vld [vmem:[%s10 + $0x14c] sm:$0xf]
          %v1594 = vld [vmem:[%s10 + $0x150] sm:$0xff]
          %v1595 = vld [vmem:[%s10 + $0x158] sm:$0xff]
          %v1596 = vld [vmem:[%s10 + $0x160] sm:$0xff]
          %v1597 = vld [vmem:[%s10 + $0x168] sm:$0xf]
          %v1598 = vld [vmem:[%s10 + $0x16c] sm:$0xff]
          %v1599 = vld [vmem:[%s10 + $0x174] sm:$0xff]
          %v1600 = vld [vmem:[%s10 + $0x17c] sm:$0xff]
          %v1601 = vld [vmem:[%s10 + $0x184] sm:$0xf]
          %v1602 = vld [vmem:[%s10 + $0x188] sm:$0xff]
          %v1603 = vld [vmem:[%s10 + $0x190] sm:$0xff]
          %v1604 = vld [vmem:[%s10 + $0x198] sm:$0xff]
          %v1605 = vld [vmem:[%s10 + $0x1a0] sm:$0xf]
          %v1606 = vld [vmem:[%s10 + $0x1a4] sm:$0xff]
          %v1607 = vld [vmem:[%s10 + $0x1ac] sm:$0xff]
          %v1608 = vld [vmem:[%s10 + $0x1b4] sm:$0xff]
          %v1609 = vld [vmem:[%s10 + $0x1bc] sm:$0xf]
          %v1610 = vld [vmem:[#allocation3] sm:$0x7f]
          %v1612 = vlaneseq
          %v1613 = vshrl.u32 %v1612, 7
          %v1614 = vsub.s32 0, %v1613
          %v1615 = vrot.slane %v1610, %v1614
          %v1616 = vlaneseq
          %v1617 = vshrl.u32 %v1616, 7
          %v1618 = vsub.s32 1, %v1617
          %v1619 = vrot.slane %v1610, %v1618
          %v1620 = vlaneseq
          %v1621 = vshrl.u32 %v1620, 7
          %v1622 = vsub.s32 2, %v1621
          %v1623 = vrot.slane %v1610, %v1622
          %v1624 = vlaneseq
          %v1625 = vshrl.u32 %v1624, 7
          %v1626 = vsub.s32 3, %v1625
          %v1627 = vrot.slane %v1610, %v1626
          %v1628 = vlaneseq
          %v1629 = vshrl.u32 %v1628, 7
          %v1630 = vsub.s32 4, %v1629
          %v1631 = vrot.slane %v1610, %v1630
          %v1632 = vlaneseq
          %v1633 = vshrl.u32 %v1632, 7
          %v1634 = vsub.s32 5, %v1633
          %v1635 = vrot.slane %v1610, %v1634
          %v1636 = vlaneseq
          %v1637 = vshrl.u32 %v1636, 7
          %v1638 = vsub.s32 6, %v1637
          %v1639 = vrot.slane %v1610, %v1638
          %v1711 = vunpack.c.l.b16 %v1546
          %v1712 = vunpack.c.h.b16 %v1546
          %v1713 = vunpack.c.l.b16 %v1547
          %v1714 = vunpack.c.h.b16 %v1547
          %v1715 = vunpack.c.l.b16 %v1548
          %v1716 = vunpack.c.h.b16 %v1548
          %v1717 = vunpack.c.l.b16 %v1549
          %v1718 = vunpack.c.l.b16 %v1550
          %v1719 = vunpack.c.h.b16 %v1550
          %v1720 = vunpack.c.l.b16 %v1551
          %v1721 = vunpack.c.h.b16 %v1551
          %v1722 = vunpack.c.l.b16 %v1552
          %v1723 = vunpack.c.h.b16 %v1552
          %v1724 = vunpack.c.l.b16 %v1553
          %v1725 = vunpack.c.l.b16 %v1554
          %v1726 = vunpack.c.h.b16 %v1554
          %v1727 = vunpack.c.l.b16 %v1555
          %v1728 = vunpack.c.h.b16 %v1555
          %v1729 = vunpack.c.l.b16 %v1556
          %v1730 = vunpack.c.h.b16 %v1556
          %v1731 = vunpack.c.l.b16 %v1557
          %v1732 = vunpack.c.l.b16 %v1558
          %v1733 = vunpack.c.h.b16 %v1558
          %v1734 = vunpack.c.l.b16 %v1559
          %v1735 = vunpack.c.h.b16 %v1559
          %v1736 = vunpack.c.l.b16 %v1560
          %v1737 = vunpack.c.h.b16 %v1560
          %v1738 = vunpack.c.l.b16 %v1561
          %v1739 = vunpack.c.l.b16 %v1562
          %v1740 = vunpack.c.h.b16 %v1562
          %v1741 = vunpack.c.l.b16 %v1563
          %v1742 = vunpack.c.h.b16 %v1563
          %v1743 = vunpack.c.l.b16 %v1564
          %v1744 = vunpack.c.h.b16 %v1564
          %v1745 = vunpack.c.l.b16 %v1565
          %v1746 = vunpack.c.l.b16 %v1566
          %v1747 = vunpack.c.h.b16 %v1566
          %v1748 = vunpack.c.l.b16 %v1567
          %v1749 = vunpack.c.h.b16 %v1567
          %v1750 = vunpack.c.l.b16 %v1568
          %v1751 = vunpack.c.h.b16 %v1568
          %v1752 = vunpack.c.l.b16 %v1569
          %v1753 = vunpack.c.l.b16 %v1570
          %v1754 = vunpack.c.h.b16 %v1570
          %v1755 = vunpack.c.l.b16 %v1571
          %v1756 = vunpack.c.h.b16 %v1571
          %v1757 = vunpack.c.l.b16 %v1572
          %v1758 = vunpack.c.h.b16 %v1572
          %v1759 = vunpack.c.l.b16 %v1573
          %v1760 = vunpack.c.l.b16 %v1574
          %v1761 = vunpack.c.h.b16 %v1574
          %v1762 = vunpack.c.l.b16 %v1575
          %v1763 = vunpack.c.h.b16 %v1575
          %v1764 = vunpack.c.l.b16 %v1576
          %v1765 = vunpack.c.h.b16 %v1576
          %v1766 = vunpack.c.l.b16 %v1577
          %v1767 = vunpack.c.l.b16 %v1578
          %v1768 = vunpack.c.h.b16 %v1578
          %v1769 = vunpack.c.l.b16 %v1579
          %v1770 = vunpack.c.h.b16 %v1579
          %v1771 = vunpack.c.l.b16 %v1580
          %v1772 = vunpack.c.h.b16 %v1580
          %v1773 = vunpack.c.l.b16 %v1581
          %v1774 = vunpack.c.l.b16 %v1582
          %v1775 = vunpack.c.h.b16 %v1582
          %v1776 = vunpack.c.l.b16 %v1583
          %v1777 = vunpack.c.h.b16 %v1583
          %v1778 = vunpack.c.l.b16 %v1584
          %v1779 = vunpack.c.h.b16 %v1584
          %v1780 = vunpack.c.l.b16 %v1585
          %v1781 = vunpack.c.l.b16 %v1586
          %v1782 = vunpack.c.h.b16 %v1586
          %v1783 = vunpack.c.l.b16 %v1587
          %v1784 = vunpack.c.h.b16 %v1587
          %v1785 = vunpack.c.l.b16 %v1588
          %v1786 = vunpack.c.h.b16 %v1588
          %v1787 = vunpack.c.l.b16 %v1589
          %v1788 = vunpack.c.l.b16 %v1590
          %v1789 = vunpack.c.h.b16 %v1590
          %v1790 = vunpack.c.l.b16 %v1591
          %v1791 = vunpack.c.h.b16 %v1591
          %v1792 = vunpack.c.l.b16 %v1592
          %v1793 = vunpack.c.h.b16 %v1592
          %v1794 = vunpack.c.l.b16 %v1593
          %v1795 = vunpack.c.l.b16 %v1594
          %v1796 = vunpack.c.h.b16 %v1594
          %v1797 = vunpack.c.l.b16 %v1595
          %v1798 = vunpack.c.h.b16 %v1595
          %v1799 = vunpack.c.l.b16 %v1596
          %v1800 = vunpack.c.h.b16 %v1596
          %v1801 = vunpack.c.l.b16 %v1597
          %v1802 = vunpack.c.l.b16 %v1598
          %v1803 = vunpack.c.h.b16 %v1598
          %v1804 = vunpack.c.l.b16 %v1599
          %v1805 = vunpack.c.h.b16 %v1599
          %v1806 = vunpack.c.l.b16 %v1600
          %v1807 = vunpack.c.h.b16 %v1600
          %v1808 = vunpack.c.l.b16 %v1601
          %v1809 = vunpack.c.l.b16 %v1602
          %v1810 = vunpack.c.h.b16 %v1602
          %v1811 = vunpack.c.l.b16 %v1603
          %v1812 = vunpack.c.h.b16 %v1603
          %v1813 = vunpack.c.l.b16 %v1604
          %v1814 = vunpack.c.h.b16 %v1604
          %v1815 = vunpack.c.l.b16 %v1605
          %v1816 = vunpack.c.l.b16 %v1606
          %v1817 = vunpack.c.h.b16 %v1606
          %v1818 = vunpack.c.l.b16 %v1607
          %v1819 = vunpack.c.h.b16 %v1607
          %v1820 = vunpack.c.l.b16 %v1608
          %v1821 = vunpack.c.h.b16 %v1608
          %v1822 = vunpack.c.l.b16 %v1609
          %v1823 = vpack.c.b16 %v1718, %v1711
          %v1824 = vpack.c.b16 %v1719, %v1712
          %v1825 = vpack.c.b16 %v1720, %v1713
          %v1826 = vpack.c.b16 %v1721, %v1714
          %v1827 = vpack.c.b16 %v1722, %v1715
          %v1828 = vpack.c.b16 %v1723, %v1716
          %v1829 = vpack.c.b16 %v1724, %v1717
          %v1830 = vpack.c.b16 %v1732, %v1725
          %v1831 = vpack.c.b16 %v1733, %v1726
          %v1832 = vpack.c.b16 %v1734, %v1727
          %v1833 = vpack.c.b16 %v1735, %v1728
          %v1834 = vpack.c.b16 %v1736, %v1729
          %v1835 = vpack.c.b16 %v1737, %v1730
          %v1836 = vpack.c.b16 %v1738, %v1731
          %v1837 = vpack.c.b16 %v1746, %v1739
          %v1838 = vpack.c.b16 %v1747, %v1740
          %v1839 = vpack.c.b16 %v1748, %v1741
          %v1840 = vpack.c.b16 %v1749, %v1742
          %v1841 = vpack.c.b16 %v1750, %v1743
          %v1842 = vpack.c.b16 %v1751, %v1744
          %v1843 = vpack.c.b16 %v1752, %v1745
          %v1844 = vpack.c.b16 %v1760, %v1753
          %v1845 = vpack.c.b16 %v1761, %v1754
          %v1846 = vpack.c.b16 %v1762, %v1755
          %v1847 = vpack.c.b16 %v1763, %v1756
          %v1848 = vpack.c.b16 %v1764, %v1757
          %v1849 = vpack.c.b16 %v1765, %v1758
          %v1850 = vpack.c.b16 %v1766, %v1759
          %v1851 = vpack.c.b16 %v1774, %v1767
          %v1852 = vpack.c.b16 %v1775, %v1768
          %v1853 = vpack.c.b16 %v1776, %v1769
          %v1854 = vpack.c.b16 %v1777, %v1770
          %v1855 = vpack.c.b16 %v1778, %v1771
          %v1856 = vpack.c.b16 %v1779, %v1772
          %v1857 = vpack.c.b16 %v1780, %v1773
          %v1858 = vpack.c.b16 %v1788, %v1781
          %v1859 = vpack.c.b16 %v1789, %v1782
          %v1860 = vpack.c.b16 %v1790, %v1783
          %v1861 = vpack.c.b16 %v1791, %v1784
          %v1862 = vpack.c.b16 %v1792, %v1785
          %v1863 = vpack.c.b16 %v1793, %v1786
          %v1864 = vpack.c.b16 %v1794, %v1787
          %v1865 = vpack.c.b16 %v1802, %v1795
          %v1866 = vpack.c.b16 %v1803, %v1796
          %v1867 = vpack.c.b16 %v1804, %v1797
          %v1868 = vpack.c.b16 %v1805, %v1798
          %v1869 = vpack.c.b16 %v1806, %v1799
          %v1870 = vpack.c.b16 %v1807, %v1800
          %v1871 = vpack.c.b16 %v1808, %v1801
          %v1872 = vpack.c.b16 %v1816, %v1809
          %v1873 = vpack.c.b16 %v1817, %v1810
          %v1874 = vpack.c.b16 %v1818, %v1811
          %v1875 = vpack.c.b16 %v1819, %v1812
          %v1876 = vpack.c.b16 %v1820, %v1813
          %v1877 = vpack.c.b16 %v1821, %v1814
          %v1878 = vpack.c.b16 %v1822, %v1815
          %1935 = vmatprep.subr.bf16.mxu0 %v1824
          %1936 = vmatpush1.bf16.msra.mxu0 %v1823
          %1937 = vmatprep.subr.bf16.mxu0 %v1831
          %1938 = vmatpush1.bf16.msra.mxu0 %v1830
          %1939 = vmatprep.subr.bf16.mxu0 %v1838
          %1940 = vmatpush1.bf16.msra.mxu0 %v1837
          %1941 = vmatprep.subr.bf16.mxu0 %v1845
          %1942 = vmatpush1.bf16.msra.mxu0 %v1844
          %1943 = vmatprep.subr.bf16.mxu0 %v1852
          %1944 = vmatpush1.bf16.msra.mxu0 %v1851
          %1945 = vmatprep.subr.bf16.mxu0 %v1859
          %1946 = vmatpush1.bf16.msra.mxu0 %v1858
          %1947 = vmatprep.subr.bf16.mxu0 %v1866
          %1948 = vmatpush1.bf16.msra.mxu0 %v1865
          %1949 = vmatprep.subr.bf16.mxu0 %v1873
          %1950 = vmatpush1.bf16.msra.mxu0 %v1872
          %1951 = vmatprep.subr.bf16.mxu0 0
          %1952 = vmatpush1.bf16.msra.mxu0 0
          %1953 = vmatprep.subr.bf16.mxu0 0
          %1954 = vmatpush1.bf16.msra.mxu0 0
          %1955 = vmatprep.subr.bf16.mxu0 0
          %1956 = vmatpush1.bf16.msra.mxu0 0
          %1957 = vmatprep.subr.bf16.mxu0 0
          %1958 = vmatpush1.bf16.msra.mxu0 0
          %1959 = vmatprep.subr.bf16.mxu0 0
          %1960 = vmatpush1.bf16.msra.mxu0 0
          %1961 = vmatprep.subr.bf16.mxu0 0
          %1962 = vmatpush1.bf16.msra.mxu0 0
          %1963 = vmatprep.subr.bf16.mxu0 0
          %1964 = vmatpush1.bf16.msra.mxu0 0
          %1965 = vmatprep.subr.bf16.mxu0 0
          %1966 = vmatpush1.bf16.msra.mxu0 0
          %1967 = vmatprep.mubr.bf16.mxu0 0
          %1968 = vmatmul.mubr.bf16.gmra.mrb[0].mxu0 %v1545
          %v1969 = vpop.f32.mrb[0].mxu0
          %v1970 = vadd.f32 %v1615, %v1969
          %v1971 = vpop.f32.mrb[0].mxu0
          %v1972 = vadd.f32 %v1619, %v1971
          %v1973 = vpop.f32.mrb[0].mxu0
          %v1974 = vpop.f32.mrb[0].mxu0
          %1975 = vdwg.mxu0
          %1976 = vmatprep.subr.bf16.mxu0 %v1826
          %1977 = vmatpush1.bf16.msra.mxu0 %v1825
          %1978 = vmatprep.subr.bf16.mxu0 %v1833
          %1979 = vmatpush1.bf16.msra.mxu0 %v1832
          %1980 = vmatprep.subr.bf16.mxu0 %v1840
          %1981 = vmatpush1.bf16.msra.mxu0 %v1839
          %1982 = vmatprep.subr.bf16.mxu0 %v1847
          %1983 = vmatpush1.bf16.msra.mxu0 %v1846
          %1984 = vmatprep.subr.bf16.mxu0 %v1854
          %1985 = vmatpush1.bf16.msra.mxu0 %v1853
          %1986 = vmatprep.subr.bf16.mxu0 %v1861
          %1987 = vmatpush1.bf16.msra.mxu0 %v1860
          %1988 = vmatprep.subr.bf16.mxu0 %v1868
          %1989 = vmatpush1.bf16.msra.mxu0 %v1867
          %1990 = vmatprep.subr.bf16.mxu0 %v1875
          %1991 = vmatpush1.bf16.msra.mxu0 %v1874
          %1992 = vmatprep.subr.bf16.mxu0 0
          %1993 = vmatpush1.bf16.msra.mxu0 0
          %1994 = vmatprep.subr.bf16.mxu0 0
          %1995 = vmatpush1.bf16.msra.mxu0 0
          %1996 = vmatprep.subr.bf16.mxu0 0
          %1997 = vmatpush1.bf16.msra.mxu0 0
          %1998 = vmatprep.subr.bf16.mxu0 0
          %1999 = vmatpush1.bf16.msra.mxu0 0
          %2000 = vmatprep.subr.bf16.mxu0 0
          %2001 = vmatpush1.bf16.msra.mxu0 0
          %2002 = vmatprep.subr.bf16.mxu0 0
          %2003 = vmatpush1.bf16.msra.mxu0 0
          %2004 = vmatprep.subr.bf16.mxu0 0
          %2005 = vmatpush1.bf16.msra.mxu0 0
          %2006 = vmatprep.subr.bf16.mxu0 0
          %2007 = vmatpush1.bf16.msra.mxu0 0
          %2008 = vmatprep.mubr.bf16.mxu0 0
          %2009 = vmatmul.mubr.bf16.gmra.mrb[0].mxu0 %v1545
          %v2010 = vpop.f32.mrb[0].mxu0
          %v2011 = vadd.f32 %v1623, %v2010
          %v2012 = vpop.f32.mrb[0].mxu0
          %v2013 = vadd.f32 %v1627, %v2012
          %v2014 = vpop.f32.mrb[0].mxu0
          %v2015 = vpop.f32.mrb[0].mxu0
          %2016 = vdwg.mxu0
          %2017 = vmatprep.subr.bf16.mxu0 %v1828
          %2018 = vmatpush1.bf16.msra.mxu0 %v1827
          %2019 = vmatprep.subr.bf16.mxu0 %v1835
          %2020 = vmatpush1.bf16.msra.mxu0 %v1834
          %2021 = vmatprep.subr.bf16.mxu0 %v1842
          %2022 = vmatpush1.bf16.msra.mxu0 %v1841
          %2023 = vmatprep.subr.bf16.mxu0 %v1849
          %2024 = vmatpush1.bf16.msra.mxu0 %v1848
          %2025 = vmatprep.subr.bf16.mxu0 %v1856
          %2026 = vmatpush1.bf16.msra.mxu0 %v1855
          %2027 = vmatprep.subr.bf16.mxu0 %v1863
          %2028 = vmatpush1.bf16.msra.mxu0 %v1862
          %2029 = vmatprep.subr.bf16.mxu0 %v1870
          %2030 = vmatpush1.bf16.msra.mxu0 %v1869
          %2031 = vmatprep.subr.bf16.mxu0 %v1877
          %2032 = vmatpush1.bf16.msra.mxu0 %v1876
          %2033 = vmatprep.subr.bf16.mxu0 0
          %2034 = vmatpush1.bf16.msra.mxu0 0
          %2035 = vmatprep.subr.bf16.mxu0 0
          %2036 = vmatpush1.bf16.msra.mxu0 0
          %2037 = vmatprep.subr.bf16.mxu0 0
          %2038 = vmatpush1.bf16.msra.mxu0 0
          %2039 = vmatprep.subr.bf16.mxu0 0
          %2040 = vmatpush1.bf16.msra.mxu0 0
          %2041 = vmatprep.subr.bf16.mxu0 0
          %2042 = vmatpush1.bf16.msra.mxu0 0
          %2043 = vmatprep.subr.bf16.mxu0 0
          %2044 = vmatpush1.bf16.msra.mxu0 0
          %2045 = vmatprep.subr.bf16.mxu0 0
          %2046 = vmatpush1.bf16.msra.mxu0 0
          %2047 = vmatprep.subr.bf16.mxu0 0
          %2048 = vmatpush1.bf16.msra.mxu0 0
          %2049 = vmatprep.mubr.bf16.mxu0 0
          %2050 = vmatmul.mubr.bf16.gmra.mrb[0].mxu0 %v1545
          %v2051 = vpop.f32.mrb[0].mxu0
          %v2052 = vadd.f32 %v1631, %v2051
          %v2053 = vpop.f32.mrb[0].mxu0
          %v2054 = vadd.f32 %v1635, %v2053
          %v2055 = vpop.f32.mrb[0].mxu0
          %v2056 = vpop.f32.mrb[0].mxu0
          %2057 = vdwg.mxu0
          %2058 = vmatprep.subr.bf16.mxu0 0
          %2059 = vmatpush1.bf16.msra.mxu0 %v1829
          %2060 = vmatprep.subr.bf16.mxu0 0
          %2061 = vmatpush1.bf16.msra.mxu0 %v1836
          %2062 = vmatprep.subr.bf16.mxu0 0
          %2063 = vmatpush1.bf16.msra.mxu0 %v1843
          %2064 = vmatprep.subr.bf16.mxu0 0
          %2065 = vmatpush1.bf16.msra.mxu0 %v1850
          %2066 = vmatprep.subr.bf16.mxu0 0
          %2067 = vmatpush1.bf16.msra.mxu0 %v1857
          %2068 = vmatprep.subr.bf16.mxu0 0
          %2069 = vmatpush1.bf16.msra.mxu0 %v1864
          %2070 = vmatprep.subr.bf16.mxu0 0
          %2071 = vmatpush1.bf16.msra.mxu0 %v1871
          %2072 = vmatprep.subr.bf16.mxu0 0
          %2073 = vmatpush1.bf16.msra.mxu0 %v1878
          %2074 = vmatprep.subr.bf16.mxu0 0
          %2075 = vmatpush1.bf16.msra.mxu0 0
          %2076 = vmatprep.subr.bf16.mxu0 0
          %2077 = vmatpush1.bf16.msra.mxu0 0
          %2078 = vmatprep.subr.bf16.mxu0 0
          %2079 = vmatpush1.bf16.msra.mxu0 0
          %2080 = vmatprep.subr.bf16.mxu0 0
          %2081 = vmatpush1.bf16.msra.mxu0 0
          %2082 = vmatprep.subr.bf16.mxu0 0
          %2083 = vmatpush1.bf16.msra.mxu0 0
          %2084 = vmatprep.subr.bf16.mxu0 0
          %2085 = vmatpush1.bf16.msra.mxu0 0
          %2086 = vmatprep.subr.bf16.mxu0 0
          %2087 = vmatpush1.bf16.msra.mxu0 0
          %2088 = vmatprep.subr.bf16.mxu0 0
          %2089 = vmatpush1.bf16.msra.mxu0 0
          %2090 = vmatprep.mubr.bf16.mxu0 0
          %2091 = vmatmul.mubr.bf16.gmra.mrb[0].mxu0 %v1545
          %v2092 = vpop.f32.mrb[0].mxu0
          %v2093 = vadd.f32 %v1639, %v2092
          %v2094 = vpop.f32.mrb[0].mxu0
          %v2095 = vpop.f32.mrb[0].mxu0
          %v2096 = vpop.f32.mrb[0].mxu0
          %2097 = vdwg.mxu0
          %v2098 = vmax.f32 %v1970, 0.0
          %v2099 = vmax.f32 %v1972, 0.0
          %v2100 = vmax.f32 %v2011, 0.0
          %v2101 = vmax.f32 %v2013, 0.0
          %v2102 = vmax.f32 %v2052, 0.0
          %v2103 = vmax.f32 %v2054, 0.0
          %v2104 = vmax.f32 %v2093, 0.0
          %v2105 = vpack.c.bf16 %v2098, %v2098
          %v2106 = vpack.c.bf16 %v2099, %v2099
          %v2107 = vpack.c.bf16 %v2100, %v2100
          %v2108 = vpack.c.bf16 %v2101, %v2101
          %v2109 = vpack.c.bf16 %v2102, %v2102
          %v2110 = vpack.c.bf16 %v2103, %v2103
          %v2111 = vpack.c.bf16 %v2104, %v2104
          %v2112 = vld [vmem:[%s13] sm:$0xf]
          %v2113 = vld [vmem:[%s13 + $0x4] sm:$0xf]
          %v2114 = vld [vmem:[%s13 + $0x8] sm:$0xf]
          %v2115 = vld [vmem:[%s13 + $0xc] sm:$0xf]
          %v2116 = vld [vmem:[%s13 + $0x10] sm:$0xf]
          %v2117 = vld [vmem:[%s13 + $0x14] sm:$0xf]
          %v2118 = vld [vmem:[%s13 + $0x18] sm:$0xf]
          %v2119 = vld [vmem:[%s13 + $0x1c] sm:$0xf]
          %v2120 = vld [vmem:[%s13 + $0x20] sm:$0xf]
          %v2121 = vld [vmem:[%s13 + $0x24] sm:$0xf]
          %v2122 = vld [vmem:[%s13 + $0x28] sm:$0xf]
          %v2123 = vld [vmem:[%s13 + $0x2c] sm:$0xf]
          %v2124 = vld [vmem:[%s13 + $0x30] sm:$0xf]
          %v2125 = vld [vmem:[%s13 + $0x34] sm:$0xf]
          %v2126 = vld [vmem:[%s13 + $0x38] sm:$0xf]
          %v2127 = vld [vmem:[%s13 + $0x3c] sm:$0xf]
          %v2128 = vld [vmem:[%s13 + $0x40] sm:$0xf]
          %v2129 = vld [vmem:[%s13 + $0x44] sm:$0xf]
          %v2130 = vld [vmem:[%s13 + $0x48] sm:$0xf]
          %v2131 = vld [vmem:[%s13 + $0x4c] sm:$0xf]
          %v2132 = vld [vmem:[%s13 + $0x50] sm:$0xf]
          %v2133 = vld [vmem:[%s13 + $0x54] sm:$0xf]
          %v2134 = vld [vmem:[%s13 + $0x58] sm:$0xf]
          %v2135 = vld [vmem:[%s13 + $0x5c] sm:$0xf]
          %v2136 = vld [vmem:[%s13 + $0x60] sm:$0xf]
          %v2137 = vld [vmem:[%s13 + $0x64] sm:$0xf]
          %v2138 = vld [vmem:[%s13 + $0x68] sm:$0xf]
          %v2139 = vld [vmem:[%s13 + $0x6c] sm:$0xf]
          %v2140 = vld [vmem:[%s13 + $0x70] sm:$0xf]
          %v2141 = vld [vmem:[%s13 + $0x74] sm:$0xf]
          %v2142 = vld [vmem:[%s13 + $0x78] sm:$0xf]
          %v2143 = vld [vmem:[%s13 + $0x7c] sm:$0xf]
          %v2144 = vld [vmem:[%s13 + $0x80] sm:$0xf]
          %v2145 = vld [vmem:[%s13 + $0x84] sm:$0xf]
          %v2146 = vld [vmem:[%s13 + $0x88] sm:$0xf]
          %v2147 = vld [vmem:[%s13 + $0x8c] sm:$0xf]
          %v2148 = vld [vmem:[%s13 + $0x90] sm:$0xf]
          %v2149 = vld [vmem:[%s13 + $0x94] sm:$0xf]
          %v2150 = vld [vmem:[%s13 + $0x98] sm:$0xf]
          %v2151 = vld [vmem:[%s13 + $0x9c] sm:$0xf]
          %v2152 = vld [vmem:[%s13 + $0xa0] sm:$0xf]
          %v2153 = vld [vmem:[%s13 + $0xa4] sm:$0xf]
          %v2154 = vld [vmem:[%s13 + $0xa8] sm:$0xf]
          %v2155 = vld [vmem:[%s13 + $0xac] sm:$0xf]
          %v2156 = vld [vmem:[%s13 + $0xb0] sm:$0xf]
          %v2157 = vld [vmem:[%s13 + $0xb4] sm:$0xf]
          %v2158 = vld [vmem:[%s13 + $0xb8] sm:$0xf]
          %v2159 = vld [vmem:[%s13 + $0xbc] sm:$0xf]
          %v2160 = vld [vmem:[%s13 + $0xc0] sm:$0xf]
          %v2161 = vld [vmem:[%s13 + $0xc4] sm:$0xf]
          %v2162 = vld [vmem:[%s13 + $0xc8] sm:$0xf]
          %v2163 = vld [vmem:[%s13 + $0xcc] sm:$0xf]
          %v2164 = vld [vmem:[%s13 + $0xd0] sm:$0xf]
          %v2165 = vld [vmem:[%s13 + $0xd4] sm:$0xf]
          %v2166 = vld [vmem:[%s13 + $0xd8] sm:$0xf]
          %v2167 = vld [vmem:[%s13 + $0xdc] sm:$0xf]
          %v2168 = vld [vmem:[%s13 + $0xe0] sm:$0xf]
          %v2169 = vld [vmem:[%s13 + $0xe4] sm:$0xf]
          %v2170 = vld [vmem:[%s13 + $0xe8] sm:$0xf]
          %v2171 = vld [vmem:[%s13 + $0xec] sm:$0xf]
          %v2172 = vld [vmem:[%s13 + $0xf0] sm:$0xf]
          %v2173 = vld [vmem:[%s13 + $0xf4] sm:$0xf]
          %v2174 = vld [vmem:[%s13 + $0xf8] sm:$0xf]
          %v2175 = vld [vmem:[%s13 + $0xfc] sm:$0xf]
          %v2176 = vld [vmem:[%s13 + $0x100] sm:$0xf]
          %v2177 = vld [vmem:[%s13 + $0x104] sm:$0xf]
          %v2178 = vld [vmem:[%s13 + $0x108] sm:$0xf]
          %v2179 = vld [vmem:[%s13 + $0x10c] sm:$0xf]
          %v2180 = vld [vmem:[%s13 + $0x110] sm:$0xf]
          %v2181 = vld [vmem:[%s13 + $0x114] sm:$0xf]
          %v2182 = vld [vmem:[%s13 + $0x118] sm:$0xf]
          %v2183 = vld [vmem:[%s13 + $0x11c] sm:$0xf]
          %v2184 = vld [vmem:[%s13 + $0x120] sm:$0xf]
          %v2185 = vld [vmem:[%s13 + $0x124] sm:$0xf]
          %v2186 = vld [vmem:[%s13 + $0x128] sm:$0xf]
          %v2187 = vld [vmem:[%s13 + $0x12c] sm:$0xf]
          %v2188 = vld [vmem:[%s13 + $0x130] sm:$0xf]
          %v2189 = vld [vmem:[%s13 + $0x134] sm:$0xf]
          %v2190 = vld [vmem:[%s13 + $0x138] sm:$0xf]
          %v2191 = vld [vmem:[%s13 + $0x13c] sm:$0xf]
          %v2192 = vld [vmem:[%s13 + $0x140] sm:$0xf]
          %v2193 = vld [vmem:[%s13 + $0x144] sm:$0xf]
          %v2194 = vld [vmem:[%s13 + $0x148] sm:$0xf]
          %v2195 = vld [vmem:[%s13 + $0x14c] sm:$0xf]
          %v2196 = vld [vmem:[%s13 + $0x150] sm:$0xf]
          %v2197 = vld [vmem:[%s13 + $0x154] sm:$0xf]
          %v2198 = vld [vmem:[%s13 + $0x158] sm:$0xf]
          %v2199 = vld [vmem:[%s13 + $0x15c] sm:$0xf]
          %v2200 = vld [vmem:[%s13 + $0x160] sm:$0xf]
          %v2201 = vld [vmem:[%s13 + $0x164] sm:$0xf]
          %v2202 = vld [vmem:[%s13 + $0x168] sm:$0xf]
          %v2203 = vld [vmem:[%s13 + $0x16c] sm:$0xf]
          %v2204 = vld [vmem:[%s13 + $0x170] sm:$0xf]
          %v2205 = vld [vmem:[%s13 + $0x174] sm:$0xf]
          %v2206 = vld [vmem:[%s13 + $0x178] sm:$0xf]
          %v2207 = vld [vmem:[%s13 + $0x17c] sm:$0xf]
          %v2208 = vld [vmem:[%s13 + $0x180] sm:$0xf]
          %v2209 = vld [vmem:[%s13 + $0x184] sm:$0xf]
          %v2210 = vld [vmem:[%s13 + $0x188] sm:$0xf]
          %v2211 = vld [vmem:[%s13 + $0x18c] sm:$0xf]
          %v2212 = vld [vmem:[%s13 + $0x190] sm:$0xf]
          %v2213 = vld [vmem:[%s13 + $0x194] sm:$0xf]
          %v2214 = vld [vmem:[%s13 + $0x198] sm:$0xf]
          %v2215 = vld [vmem:[%s13 + $0x19c] sm:$0xf]
          %v2216 = vld [vmem:[%s14] sm:$0x1]
          %v2218 = vlaneseq
          %v2219 = vshrl.u32 %v2218, 7
          %v2220 = vsub.s32 0, %v2219
          %v2221 = vrot.slane %v2216, %v2220
          %v2327 = vunpack.c.l.b16 %v2112
          %v2328 = vunpack.c.l.b16 %v2113
          %v2329 = vunpack.c.l.b16 %v2114
          %v2330 = vunpack.c.l.b16 %v2115
          %v2331 = vunpack.c.l.b16 %v2116
          %v2332 = vunpack.c.l.b16 %v2117
          %v2333 = vunpack.c.l.b16 %v2118
          %v2334 = vunpack.c.l.b16 %v2119
          %v2335 = vunpack.c.l.b16 %v2120
          %v2336 = vunpack.c.l.b16 %v2121
          %v2337 = vunpack.c.l.b16 %v2122
          %v2338 = vunpack.c.l.b16 %v2123
          %v2339 = vunpack.c.l.b16 %v2124
          %v2340 = vunpack.c.l.b16 %v2125
          %v2341 = vunpack.c.l.b16 %v2126
          %v2342 = vunpack.c.l.b16 %v2127
          %v2343 = vunpack.c.l.b16 %v2128
          %v2344 = vunpack.c.l.b16 %v2129
          %v2345 = vunpack.c.l.b16 %v2130
          %v2346 = vunpack.c.l.b16 %v2131
          %v2347 = vunpack.c.l.b16 %v2132
          %v2348 = vunpack.c.l.b16 %v2133
          %v2349 = vunpack.c.l.b16 %v2134
          %v2350 = vunpack.c.l.b16 %v2135
          %v2351 = vunpack.c.l.b16 %v2136
          %v2352 = vunpack.c.l.b16 %v2137
          %v2353 = vunpack.c.l.b16 %v2138
          %v2354 = vunpack.c.l.b16 %v2139
          %v2355 = vunpack.c.l.b16 %v2140
          %v2356 = vunpack.c.l.b16 %v2141
          %v2357 = vunpack.c.l.b16 %v2142
          %v2358 = vunpack.c.l.b16 %v2143
          %v2359 = vunpack.c.l.b16 %v2144
          %v2360 = vunpack.c.l.b16 %v2145
          %v2361 = vunpack.c.l.b16 %v2146
          %v2362 = vunpack.c.l.b16 %v2147
          %v2363 = vunpack.c.l.b16 %v2148
          %v2364 = vunpack.c.l.b16 %v2149
          %v2365 = vunpack.c.l.b16 %v2150
          %v2366 = vunpack.c.l.b16 %v2151
          %v2367 = vunpack.c.l.b16 %v2152
          %v2368 = vunpack.c.l.b16 %v2153
          %v2369 = vunpack.c.l.b16 %v2154
          %v2370 = vunpack.c.l.b16 %v2155
          %v2371 = vunpack.c.l.b16 %v2156
          %v2372 = vunpack.c.l.b16 %v2157
          %v2373 = vunpack.c.l.b16 %v2158
          %v2374 = vunpack.c.l.b16 %v2159
          %v2375 = vunpack.c.l.b16 %v2160
          %v2376 = vunpack.c.l.b16 %v2161
          %v2377 = vunpack.c.l.b16 %v2162
          %v2378 = vunpack.c.l.b16 %v2163
          %v2379 = vunpack.c.l.b16 %v2164
          %v2380 = vunpack.c.l.b16 %v2165
          %v2381 = vunpack.c.l.b16 %v2166
          %v2382 = vunpack.c.l.b16 %v2167
          %v2383 = vunpack.c.l.b16 %v2168
          %v2384 = vunpack.c.l.b16 %v2169
          %v2385 = vunpack.c.l.b16 %v2170
          %v2386 = vunpack.c.l.b16 %v2171
          %v2387 = vunpack.c.l.b16 %v2172
          %v2388 = vunpack.c.l.b16 %v2173
          %v2389 = vunpack.c.l.b16 %v2174
          %v2390 = vunpack.c.l.b16 %v2175
          %v2391 = vunpack.c.l.b16 %v2176
          %v2392 = vunpack.c.l.b16 %v2177
          %v2393 = vunpack.c.l.b16 %v2178
          %v2394 = vunpack.c.l.b16 %v2179
          %v2395 = vunpack.c.l.b16 %v2180
          %v2396 = vunpack.c.l.b16 %v2181
          %v2397 = vunpack.c.l.b16 %v2182
          %v2398 = vunpack.c.l.b16 %v2183
          %v2399 = vunpack.c.l.b16 %v2184
          %v2400 = vunpack.c.l.b16 %v2185
          %v2401 = vunpack.c.l.b16 %v2186
          %v2402 = vunpack.c.l.b16 %v2187
          %v2403 = vunpack.c.l.b16 %v2188
          %v2404 = vunpack.c.l.b16 %v2189
          %v2405 = vunpack.c.l.b16 %v2190
          %v2406 = vunpack.c.l.b16 %v2191
          %v2407 = vunpack.c.l.b16 %v2192
          %v2408 = vunpack.c.l.b16 %v2193
          %v2409 = vunpack.c.l.b16 %v2194
          %v2410 = vunpack.c.l.b16 %v2195
          %v2411 = vunpack.c.l.b16 %v2196
          %v2412 = vunpack.c.l.b16 %v2197
          %v2413 = vunpack.c.l.b16 %v2198
          %v2414 = vunpack.c.l.b16 %v2199
          %v2415 = vunpack.c.l.b16 %v2200
          %v2416 = vunpack.c.l.b16 %v2201
          %v2417 = vunpack.c.l.b16 %v2202
          %v2418 = vunpack.c.l.b16 %v2203
          %v2419 = vunpack.c.l.b16 %v2204
          %v2420 = vunpack.c.l.b16 %v2205
          %v2421 = vunpack.c.l.b16 %v2206
          %v2422 = vunpack.c.l.b16 %v2207
          %v2423 = vunpack.c.l.b16 %v2208
          %v2424 = vunpack.c.l.b16 %v2209
          %v2425 = vunpack.c.l.b16 %v2210
          %v2426 = vunpack.c.l.b16 %v2211
          %v2427 = vunpack.c.l.b16 %v2212
          %v2428 = vunpack.c.l.b16 %v2213
          %v2429 = vunpack.c.l.b16 %v2214
          %v2430 = vunpack.c.l.b16 %v2215
          %v2431 = vpack.c.b16 %v2328, %v2327
          %v2432 = vpack.c.b16 %v2330, %v2329
          %v2433 = vpack.c.b16 %v2332, %v2331
          %v2434 = vpack.c.b16 %v2334, %v2333
          %v2435 = vpack.c.b16 %v2336, %v2335
          %v2436 = vpack.c.b16 %v2338, %v2337
          %v2437 = vpack.c.b16 %v2340, %v2339
          %v2438 = vpack.c.b16 %v2342, %v2341
          %v2439 = vpack.c.b16 %v2344, %v2343
          %v2440 = vpack.c.b16 %v2346, %v2345
          %v2441 = vpack.c.b16 %v2348, %v2347
          %v2442 = vpack.c.b16 %v2350, %v2349
          %v2443 = vpack.c.b16 %v2352, %v2351
          %v2444 = vpack.c.b16 %v2354, %v2353
          %v2445 = vpack.c.b16 %v2356, %v2355
          %v2446 = vpack.c.b16 %v2358, %v2357
          %v2447 = vpack.c.b16 %v2360, %v2359
          %v2448 = vpack.c.b16 %v2362, %v2361
          %v2449 = vpack.c.b16 %v2364, %v2363
          %v2450 = vpack.c.b16 %v2366, %v2365
          %v2451 = vpack.c.b16 %v2368, %v2367
          %v2452 = vpack.c.b16 %v2370, %v2369
          %v2453 = vpack.c.b16 %v2372, %v2371
          %v2454 = vpack.c.b16 %v2374, %v2373
          %v2455 = vpack.c.b16 %v2376, %v2375
          %v2456 = vpack.c.b16 %v2378, %v2377
          %v2457 = vpack.c.b16 %v2380, %v2379
          %v2458 = vpack.c.b16 %v2382, %v2381
          %v2459 = vpack.c.b16 %v2384, %v2383
          %v2460 = vpack.c.b16 %v2386, %v2385
          %v2461 = vpack.c.b16 %v2388, %v2387
          %v2462 = vpack.c.b16 %v2390, %v2389
          %v2463 = vpack.c.b16 %v2392, %v2391
          %v2464 = vpack.c.b16 %v2394, %v2393
          %v2465 = vpack.c.b16 %v2396, %v2395
          %v2466 = vpack.c.b16 %v2398, %v2397
          %v2467 = vpack.c.b16 %v2400, %v2399
          %v2468 = vpack.c.b16 %v2402, %v2401
          %v2469 = vpack.c.b16 %v2404, %v2403
          %v2470 = vpack.c.b16 %v2406, %v2405
          %v2471 = vpack.c.b16 %v2408, %v2407
          %v2472 = vpack.c.b16 %v2410, %v2409
          %v2473 = vpack.c.b16 %v2412, %v2411
          %v2474 = vpack.c.b16 %v2414, %v2413
          %v2475 = vpack.c.b16 %v2416, %v2415
          %v2476 = vpack.c.b16 %v2418, %v2417
          %v2477 = vpack.c.b16 %v2420, %v2419
          %v2478 = vpack.c.b16 %v2422, %v2421
          %v2479 = vpack.c.b16 %v2424, %v2423
          %v2480 = vpack.c.b16 %v2426, %v2425
          %v2481 = vpack.c.b16 %v2428, %v2427
          %v2482 = vpack.c.b16 %v2430, %v2429
          %vm2535 = vcmask 523264
          %v2537 = vsel %vm2535, %v2111, 0
          %2539 = vmatprep.subr.bf16.mxu0 0
          %2540 = vmatpush1.bf16.msra.mxu0 %v2431
          %2541 = vmatprep.subr.bf16.mxu0 0
          %2542 = vmatpush1.bf16.msra.mxu0 %v2432
          %2543 = vmatprep.subr.bf16.mxu0 0
          %2544 = vmatpush1.bf16.msra.mxu0 %v2433
          %2545 = vmatprep.subr.bf16.mxu0 0
          %2546 = vmatpush1.bf16.msra.mxu0 %v2434
          %2547 = vmatprep.subr.bf16.mxu0 0
          %2548 = vmatpush1.bf16.msra.mxu0 %v2435
          %2549 = vmatprep.subr.bf16.mxu0 0
          %2550 = vmatpush1.bf16.msra.mxu0 %v2436
          %2551 = vmatprep.subr.bf16.mxu0 0
          %2552 = vmatpush1.bf16.msra.mxu0 %v2437
          %2553 = vmatprep.subr.bf16.mxu0 0
          %2554 = vmatpush1.bf16.msra.mxu0 %v2438
          %2555 = vmatprep.subr.bf16.mxu0 0
          %2556 = vmatpush1.bf16.msra.mxu0 %v2439
          %2557 = vmatprep.subr.bf16.mxu0 0
          %2558 = vmatpush1.bf16.msra.mxu0 %v2440
          %2559 = vmatprep.subr.bf16.mxu0 0
          %2560 = vmatpush1.bf16.msra.mxu0 %v2441
          %2561 = vmatprep.subr.bf16.mxu0 0
          %2562 = vmatpush1.bf16.msra.mxu0 %v2442
          %2563 = vmatprep.subr.bf16.mxu0 0
          %2564 = vmatpush1.bf16.msra.mxu0 %v2443
          %2565 = vmatprep.subr.bf16.mxu0 0
          %2566 = vmatpush1.bf16.msra.mxu0 %v2444
          %2567 = vmatprep.subr.bf16.mxu0 0
          %2568 = vmatpush1.bf16.msra.mxu0 %v2445
          %2569 = vmatprep.subr.bf16.mxu0 0
          %2570 = vmatpush1.bf16.msra.mxu0 %v2446
          %2571 = vmatprep.mubr.bf16.mxu0 %v2106
          %2572 = vmatmul.mubr.bf16.gmra.mrb[0].mxu0 %v2105
          %v2573 = vpop.f32.mrb[0].mxu0
          %v2574 = vadd.f32 %v2221, %v2573
          %v2575 = vpop.f32.mrb[0].mxu0
          %v2576 = vpop.f32.mrb[0].mxu0
          %v2577 = vpop.f32.mrb[0].mxu0
          %2578 = vdwg.mxu0
          %2579 = vmatprep.subr.bf16.mxu0 0
          %2580 = vmatpush1.bf16.msra.mxu0 %v2447
          %2581 = vmatprep.subr.bf16.mxu0 0
          %2582 = vmatpush1.bf16.msra.mxu0 %v2448
          %2583 = vmatprep.subr.bf16.mxu0 0
          %2584 = vmatpush1.bf16.msra.mxu0 %v2449
          %2585 = vmatprep.subr.bf16.mxu0 0
          %2586 = vmatpush1.bf16.msra.mxu0 %v2450
          %2587 = vmatprep.subr.bf16.mxu0 0
          %2588 = vmatpush1.bf16.msra.mxu0 %v2451
          %2589 = vmatprep.subr.bf16.mxu0 0
          %2590 = vmatpush1.bf16.msra.mxu0 %v2452
          %2591 = vmatprep.subr.bf16.mxu0 0
          %2592 = vmatpush1.bf16.msra.mxu0 %v2453
          %2593 = vmatprep.subr.bf16.mxu0 0
          %2594 = vmatpush1.bf16.msra.mxu0 %v2454
          %2595 = vmatprep.subr.bf16.mxu0 0
          %2596 = vmatpush1.bf16.msra.mxu0 %v2455
          %2597 = vmatprep.subr.bf16.mxu0 0
          %2598 = vmatpush1.bf16.msra.mxu0 %v2456
          %2599 = vmatprep.subr.bf16.mxu0 0
          %2600 = vmatpush1.bf16.msra.mxu0 %v2457
          %2601 = vmatprep.subr.bf16.mxu0 0
          %2602 = vmatpush1.bf16.msra.mxu0 %v2458
          %2603 = vmatprep.subr.bf16.mxu0 0
          %2604 = vmatpush1.bf16.msra.mxu0 %v2459
          %2605 = vmatprep.subr.bf16.mxu0 0
          %2606 = vmatpush1.bf16.msra.mxu0 %v2460
          %2607 = vmatprep.subr.bf16.mxu0 0
          %2608 = vmatpush1.bf16.msra.mxu0 %v2461
          %2609 = vmatprep.subr.bf16.mxu0 0
          %2610 = vmatpush1.bf16.msra.mxu0 %v2462
          %2611 = vmatprep.mubr.bf16.mxu0 %v2108
          %2612 = vmatmul.mubr.bf16.gmra.mrb[0].mxu0 %v2107
          %v2613 = vpop.f32.mrb[0].mxu0
          %v2614 = vadd.f32 %v2574, %v2613
          %v2615 = vpop.f32.mrb[0].mxu0
          %v2616 = vpop.f32.mrb[0].mxu0
          %v2617 = vpop.f32.mrb[0].mxu0
          %2618 = vdwg.mxu0
          %2619 = vmatprep.subr.bf16.mxu0 0
          %2620 = vmatpush1.bf16.msra.mxu0 %v2463
          %2621 = vmatprep.subr.bf16.mxu0 0
          %2622 = vmatpush1.bf16.msra.mxu0 %v2464
          %2623 = vmatprep.subr.bf16.mxu0 0
          %2624 = vmatpush1.bf16.msra.mxu0 %v2465
          %2625 = vmatprep.subr.bf16.mxu0 0
          %2626 = vmatpush1.bf16.msra.mxu0 %v2466
          %2627 = vmatprep.subr.bf16.mxu0 0
          %2628 = vmatpush1.bf16.msra.mxu0 %v2467
          %2629 = vmatprep.subr.bf16.mxu0 0
          %2630 = vmatpush1.bf16.msra.mxu0 %v2468
          %2631 = vmatprep.subr.bf16.mxu0 0
          %2632 = vmatpush1.bf16.msra.mxu0 %v2469
          %2633 = vmatprep.subr.bf16.mxu0 0
          %2634 = vmatpush1.bf16.msra.mxu0 %v2470
          %2635 = vmatprep.subr.bf16.mxu0 0
          %2636 = vmatpush1.bf16.msra.mxu0 %v2471
          %2637 = vmatprep.subr.bf16.mxu0 0
          %2638 = vmatpush1.bf16.msra.mxu0 %v2472
          %2639 = vmatprep.subr.bf16.mxu0 0
          %2640 = vmatpush1.bf16.msra.mxu0 %v2473
          %2641 = vmatprep.subr.bf16.mxu0 0
          %2642 = vmatpush1.bf16.msra.mxu0 %v2474
          %2643 = vmatprep.subr.bf16.mxu0 0
          %2644 = vmatpush1.bf16.msra.mxu0 %v2475
          %2645 = vmatprep.subr.bf16.mxu0 0
          %2646 = vmatpush1.bf16.msra.mxu0 %v2476
          %2647 = vmatprep.subr.bf16.mxu0 0
          %2648 = vmatpush1.bf16.msra.mxu0 %v2477
          %2649 = vmatprep.subr.bf16.mxu0 0
          %2650 = vmatpush1.bf16.msra.mxu0 %v2478
          %2651 = vmatprep.mubr.bf16.mxu0 %v2110
          %2652 = vmatmul.mubr.bf16.gmra.mrb[0].mxu0 %v2109
          %v2653 = vpop.f32.mrb[0].mxu0
          %v2654 = vadd.f32 %v2614, %v2653
          %v2655 = vpop.f32.mrb[0].mxu0
          %v2656 = vpop.f32.mrb[0].mxu0
          %v2657 = vpop.f32.mrb[0].mxu0
          %2658 = vdwg.mxu0
          %2659 = vmatprep.subr.bf16.mxu0 0
          %2660 = vmatpush1.bf16.msra.mxu0 %v2479
          %2661 = vmatprep.subr.bf16.mxu0 0
          %2662 = vmatpush1.bf16.msra.mxu0 %v2480
          %2663 = vmatprep.subr.bf16.mxu0 0
          %2664 = vmatpush1.bf16.msra.mxu0 %v2481
          %2665 = vmatprep.subr.bf16.mxu0 0
          %2666 = vmatpush1.bf16.msra.mxu0 %v2482
          %2667 = vmatprep.subr.bf16.mxu0 0
          %2668 = vmatpush1.bf16.msra.mxu0 0
          %2669 = vmatprep.subr.bf16.mxu0 0
          %2670 = vmatpush1.bf16.msra.mxu0 0
          %2671 = vmatprep.subr.bf16.mxu0 0
          %2672 = vmatpush1.bf16.msra.mxu0 0
          %2673 = vmatprep.subr.bf16.mxu0 0
          %2674 = vmatpush1.bf16.msra.mxu0 0
          %2675 = vmatprep.subr.bf16.mxu0 0
          %2676 = vmatpush1.bf16.msra.mxu0 0
          %2677 = vmatprep.subr.bf16.mxu0 0
          %2678 = vmatpush1.bf16.msra.mxu0 0
          %2679 = vmatprep.subr.bf16.mxu0 0
          %2680 = vmatpush1.bf16.msra.mxu0 0
          %2681 = vmatprep.subr.bf16.mxu0 0
          %2682 = vmatpush1.bf16.msra.mxu0 0
          %2683 = vmatprep.subr.bf16.mxu0 0
          %2684 = vmatpush1.bf16.msra.mxu0 0
          %2685 = vmatprep.subr.bf16.mxu0 0
          %2686 = vmatpush1.bf16.msra.mxu0 0
          %2687 = vmatprep.subr.bf16.mxu0 0
          %2688 = vmatpush1.bf16.msra.mxu0 0
          %2689 = vmatprep.subr.bf16.mxu0 0
          %2690 = vmatpush1.bf16.msra.mxu0 0
          %2691 = vmatprep.mubr.bf16.mxu0 0
          %2692 = vmatmul.mubr.bf16.gmra.mrb[0].mxu0 %v2537
          %v2693 = vpop.f32.mrb[0].mxu0
          %v2694 = vadd.f32 %v2654, %v2693
          %v2695 = vpop.f32.mrb[0].mxu0
          %v2696 = vpop.f32.mrb[0].mxu0
          %v2697 = vpop.f32.mrb[0].mxu0
          %2698 = vdwg.mxu0
          %vm2699 = vcmask 97280
          %2700 = vst.msk [vmem:[#allocation6] sm:$0xff] %vm2699, %v2694
        $region88: #{tpu_custom_call.1} parent=75 // pred_fallthru
          _
        // Predicated region
        $region89: #{tpu_custom_call.1} parent=75 // pred_check
          %p2701 = pneg %p394
        $region90: #{tpu_custom_call.1} parent=75 // pred_check_branch
          %2703 = sbr.rel (%p2701) target = $region92
        $region91: #{tpu_custom_call.1} parent=75 // pred_region
          %s2705 = ssub.s32 128, 128
          %2706 = vsyncadd [#allocation7], %s2705
          %s2708 = sshll.u32 [#allocation6], 4
          %s2709 = int_to_ptr.vmem [resolvable:$true] %s2708
          %2711 = dma.vmem_to_hbm [thread:$0]  %s2709, 128, %s15, [#allocation7]
        $region92: #{tpu_custom_call.1} parent=75 // pred_fallthru
          _
        // Predicated region
        $region93: #{tpu_custom_call.1} parent=75 // pred_check
          %p2712 = pneg %p394
        $region94: #{tpu_custom_call.1} parent=75 // pred_check_branch
          %2714 = sbr.rel (%p2712) target = $region96
        $region95: #{tpu_custom_call.1} parent=75 // pred_region
          %2715 = dma.done [#allocation7], 128
        $region96: #{tpu_custom_call.1} parent=75 // pred_fallthru
          _
      $region76: #{tpu_custom_call.1} parent=5 // pred_fallthru
        _
      %p2716 = scmp.le.s32.totalorder 2, %s28
      // Predicated region
      $region97: #{tpu_custom_call.1} parent=5 // pred_check
        %p2717 = pneg %p2716
      $region98: #{tpu_custom_call.1} parent=5 // pred_check_branch
        %2719 = sbr.rel (%p2717) target = $region100
      $region99: #{tpu_custom_call.1} parent=5 // pred_region
        %s2720 = ssub.s32 %s28, 2
      $region100: #{tpu_custom_call.1} parent=5 // pred_fallthru
        _
    $region6: #{tpu_custom_call.1} parent=1 // loop_footer
      %s32 = sadd.s32 1, %s28
    $region7: #{tpu_custom_call.1} parent=1 // loop_footer_branch
      %27 = sbr.rel target = $region3
    $region8: #{tpu_custom_call.1} parent=1 // loop_exit
      _
    %2721 = vsyncpa [#allocation7], 1
    %s2722 = scalar_lea.sflag [#allocation7], 1
    %2723 = vsyncpa %s2722, 1

</llo_original>
